<compile_context>
chip_gen: v7x
topology: tpu7x:2x2x1
jax: 0.10.0
libtpu: 0.0.40
codegen_flags: <defaults>
</compile_context>

<pallas_src>
import functools

import jax
import jax.numpy as jnp
import numpy as np
from jax.experimental import pallas as pl
from jax.experimental.pallas import tpu as pltpu


def _can_block_kernel(x_ref, w1a_ref, w1b_ref, w2_ref, col_ref, ws_ref,
                      o_ref, pad_ref, *, W, HW, S):
    """One batch element: x_ref (1, C, HW) -> o_ref (1, C, HW)."""
    # ---------------- Channel attention ----------------
    # Global avg / max pool over H*W: lane reduces straight from the ref
    # (separate loads keep live ranges short -> no vreg spills).
    avg_c = jnp.mean(x_ref[0], axis=1, keepdims=True)            # (C, 1)
    max_c = jnp.max(x_ref[0], axis=1, keepdims=True)             # (C, 1)

    # conv1 (1x1, 2C -> hidden, no bias): weights pre-split/transposed so the
    # contraction over C is a sublane reduce; conv2 is a lane reduce.
    pre = w1a_ref[...] * avg_c + w1b_ref[...] * max_c            # (C, hidden)
    h = jax.nn.sigmoid(jnp.sum(pre, axis=0, keepdims=True))      # (1, hidden)
    ca = jax.nn.sigmoid(jnp.sum(w2_ref[...] * h, axis=1, keepdims=True))  # (C, 1)

    # x1 = x * ca, staged in the (VMEM) output block.
    o_ref[0] = x_ref[0] * ca

    # ---------------- Spatial attention ----------------
    avg_s = jnp.mean(o_ref[0], axis=0, keepdims=True)            # (1, HW)
    max_s = jnp.max(o_ref[0], axis=0, keepdims=True)             # (1, HW)

    # Flat zero-padded maps: pixel (i, j) lives at index S + i*W + j; the
    # regions [0, S) and [S+HW, PADW) stay zero (H-direction zero padding).
    # Re-zero every step so the scratch is valid under "parallel" semantics.
    pad_ref[...] = jnp.zeros_like(pad_ref)
    pad_ref[0:1, S:S + HW] = avg_s
    pad_ref[1:2, S:S + HW] = max_s

    # Column-validity masks (precomputed in the wrapper), one per kw tap.
    cmask = [col_ref[k:k + 1, :] for k in range(7)]              # each (1, HW)

    # 7x7 cross-correlation == nn.Conv2d(2, 1, 7, padding=3, bias=False).
    base = S - (3 * W + 3)
    acc = None
    for kh in range(7):
        for kw in range(7):
            off = base + kh * W + kw                             # static shift
            t = kh * 7 + kw
            win = pad_ref[:, off:off + HW]                       # (2, HW)
            tap = (ws_ref[t] * win[0:1, :] +
                   ws_ref[49 + t] * win[1:2, :]) * cmask[kw]
            acc = tap if acc is None else acc + tap
    sa = jax.nn.sigmoid(acc)                                     # (1, HW)

    o_ref[0] = (o_ref[0] * sa).astype(o_ref.dtype)


def can_block_forward(x_nchw, w1, w2, ws):
    """x_nchw: (B, C, H, W) f32. w1:(hidden,2C), w2:(C,hidden), ws:(1,2,7,7)."""
    B, C, H, W = x_nchw.shape
    hidden = w1.shape[0]
    HW = H * W

    # Interior start S: first 128-multiple >= 3W+3 so the interior store is
    # lane-aligned and every tap offset is non-negative.
    S = ((3 * W + 3 + 127) // 128) * 128
    PADW = ((S + HW + 3 * W + 3 + 127) // 128) * 128

    x_flat = x_nchw.reshape(B, C, HW)                            # free reshape
    w1a_t = jnp.transpose(w1[:, :C])                             # (C, hidden) avg half
    w1b_t = jnp.transpose(w1[:, C:])                             # (C, hidden) max half
    ws_flat = ws.reshape(-1)                                     # (98,): ci*49+kh*7+kw

    # Column masks: tap (.., kw) is valid iff 0 <= (p % W) + kw - 3 < W.
    cols = jnp.arange(HW, dtype=jnp.int32) % W
    col_ok = jnp.stack(
        [jnp.logical_and(cols + (kw - 3) >= 0, cols + (kw - 3) < W)
         for kw in range(7)], axis=0).astype(jnp.float32)        # (7, HW)

    kernel = functools.partial(_can_block_kernel, W=W, HW=HW, S=S)

    out_flat = pl.pallas_call(
        kernel,
        out_shape=jax.ShapeDtypeStruct((B, C, HW), x_nchw.dtype),
        grid_spec=pltpu.PrefetchScalarGridSpec(
            num_scalar_prefetch=0,
            grid=(B,),
            in_specs=[
                pl.BlockSpec((1, C, HW), lambda b: (b, 0, 0)),
                pl.BlockSpec((C, hidden), lambda b: (0, 0)),
                pl.BlockSpec((C, hidden), lambda b: (0, 0)),
                pl.BlockSpec((C, hidden), lambda b: (0, 0)),
                pl.BlockSpec((7, HW), lambda b: (0, 0)),
                pl.BlockSpec(memory_space=pltpu.MemorySpace.SMEM),
            ],
            out_specs=pl.BlockSpec((1, C, HW), lambda b: (b, 0, 0)),
            scratch_shapes=[pltpu.VMEM((2, PADW), jnp.float32)],
        ),
        compiler_params=pltpu.CompilerParams(
            dimension_semantics=("parallel",)),
    )(x_flat, w1a_t, w1b_t, w2, col_ok, ws_flat)

    return out_flat.reshape(B, C, H, W)


def can_block_reference(x, w1, w2, ws):
    """Pure-JAX reference matching the PyTorch forward exactly (NCHW)."""
    avg = jnp.mean(x, axis=(2, 3))                               # (B, C)
    mx = jnp.max(x, axis=(2, 3))                                 # (B, C)
    cat = jnp.concatenate([avg, mx], axis=1)                     # (B, 2C)
    h = jax.nn.sigmoid(cat @ w1.T)                               # (B, hidden)
    ca = jax.nn.sigmoid(h @ w2.T)                                # (B, C)
    x1 = x * ca[:, :, None, None]

    m = jnp.mean(x1, axis=1, keepdims=True)                      # (B, 1, H, W)
    mm = jnp.max(x1, axis=1, keepdims=True)                      # (B, 1, H, W)
    s = jnp.concatenate([m, mm], axis=1)                         # (B, 2, H, W)
    conv = jax.lax.conv_general_dilated(
        s, ws, window_strides=(1, 1), padding=((3, 3), (3, 3)),
        dimension_numbers=("NCHW", "OIHW", "NCHW"))
    sa = jax.nn.sigmoid(conv)                                    # (B, 1, H, W)
    return x1 * sa


if __name__ == "__main__":
    B, C, H, W = 2, 32, 16, 16
    ratio, ksize = 16, 7
    hidden = C // ratio

    key = jax.random.PRNGKey(0)
    kx, k1, k2, k3 = jax.random.split(key, 4)
    x = jax.random.normal(kx, (B, C, H, W), dtype=jnp.float32)
    # deterministic synthetic weights (module shapes from __init__)
    w1 = 0.1 * jax.random.normal(k1, (hidden, 2 * C), dtype=jnp.float32)       # conv1 (1x1)
    w2 = 0.1 * jax.random.normal(k2, (C, hidden), dtype=jnp.float32)           # conv2 (1x1)
    ws = 0.1 * jax.random.normal(k3, (1, 2, ksize, ksize), dtype=jnp.float32)  # spatial 7x7

    out = can_block_forward(x, w1, w2, ws)
    out = jax.block_until_ready(out)

    ref = jax.block_until_ready(can_block_reference(x, w1, w2, ws))
    np.testing.assert_allclose(np.asarray(out), np.asarray(ref),
                               rtol=1e-3, atol=1e-3)
    print("KERNEL_OK")
</pallas_src>

<mosaic_0001>
module attributes {stable_mosaic.version = 11 : i64} {
  func.func @_can_block_kernel(%arg0: i32, %arg1: memref<1x32x256xf32, #tpu.memory_space<vmem>>, %arg2: memref<32x2xf32, #tpu.memory_space<vmem>>, %arg3: memref<32x2xf32, #tpu.memory_space<vmem>>, %arg4: memref<32x2xf32, #tpu.memory_space<vmem>>, %arg5: memref<7x256xf32, #tpu.memory_space<vmem>>, %arg6: memref<98xf32, #tpu.memory_space<smem>>, %arg7: memref<1x32x256xf32, #tpu.memory_space<vmem>>, %arg8: memref<2x512xf32, #tpu.memory_space<vmem>>) attributes {dimension_semantics = [#tpu.dimension_semantics<parallel>], iteration_bounds = array<i64: 2>, scalar_prefetch = 0 : i64, scratch_operands = 1 : i64, tpu.core_type = #tpu.core_type<tc>, window_params = [{transform_indices = @transform_0, window_bounds = array<i64: 1, 32, 256>}, {pipeline_mode = #tpu.pipeline_mode<synchronous>, transform_indices = @transform_1, window_bounds = array<i64: 32, 2>}, {pipeline_mode = #tpu.pipeline_mode<synchronous>, transform_indices = @transform_2, window_bounds = array<i64: 32, 2>}, {pipeline_mode = #tpu.pipeline_mode<synchronous>, transform_indices = @transform_3, window_bounds = array<i64: 32, 2>}, {pipeline_mode = #tpu.pipeline_mode<synchronous>, transform_indices = @transform_4, window_bounds = array<i64: 7, 256>}, {transform_indices = @transform_5, window_bounds = array<i64: 98>}, {transform_indices = @transform_6, window_bounds = array<i64: 1, 32, 256>}]} {
    %c0 = arith.constant 0 : index
    %c0_0 = arith.constant 0 : index
    %c0_1 = arith.constant 0 : index
    %0 = vector.load %arg1[%c0, %c0_0, %c0_1] : memref<1x32x256xf32, #tpu.memory_space<vmem>>, vector<1x32x256xf32>
    %1 = vector.shape_cast %0 : vector<1x32x256xf32> to vector<32x256xf32>
    %cst = arith.constant dense<0.000000e+00> : vector<32xf32>
    %2 = vector.multi_reduction <add>, %1, %cst [1] : vector<32x256xf32> to vector<32xf32>
    %3 = vector.shape_cast %2 : vector<32xf32> to vector<32x1xf32>
    %cst_2 = arith.constant 2.560000e+02 : f32
    %4 = vector.broadcast %cst_2 : f32 to vector<32x1xf32>
    %5 = arith.divf %3, %4 : vector<32x1xf32>
    %c0_3 = arith.constant 0 : index
    %c0_4 = arith.constant 0 : index
    %c0_5 = arith.constant 0 : index
    %6 = vector.load %arg1[%c0_3, %c0_4, %c0_5] : memref<1x32x256xf32, #tpu.memory_space<vmem>>, vector<1x32x256xf32>
    %7 = vector.shape_cast %6 : vector<1x32x256xf32> to vector<32x256xf32>
    %cst_6 = arith.constant dense<0xFF800000> : vector<32xf32>
    %8 = vector.multi_reduction <maximumf>, %7, %cst_6 [1] : vector<32x256xf32> to vector<32xf32>
    %9 = vector.shape_cast %8 : vector<32xf32> to vector<32x1xf32>
    %c0_7 = arith.constant 0 : index
    %c0_8 = arith.constant 0 : index
    %10 = vector.load %arg2[%c0_7, %c0_8] : memref<32x2xf32, #tpu.memory_space<vmem>>, vector<32x2xf32>
    %11 = vector.broadcast %5 : vector<32x1xf32> to vector<32x2xf32>
    %12 = arith.mulf %10, %11 : vector<32x2xf32>
    %c0_9 = arith.constant 0 : index
    %c0_10 = arith.constant 0 : index
    %13 = vector.load %arg3[%c0_9, %c0_10] : memref<32x2xf32, #tpu.memory_space<vmem>>, vector<32x2xf32>
    %14 = vector.broadcast %9 : vector<32x1xf32> to vector<32x2xf32>
    %15 = arith.mulf %13, %14 : vector<32x2xf32>
    %16 = arith.addf %12, %15 : vector<32x2xf32>
    %cst_11 = arith.constant dense<0.000000e+00> : vector<2xf32>
    %17 = vector.multi_reduction <add>, %16, %cst_11 [0] : vector<32x2xf32> to vector<2xf32>
    %18 = vector.shape_cast %17 : vector<2xf32> to vector<1x2xf32>
    %19 = arith.negf %18 : vector<1x2xf32>
    %20 = math.exp %19 : vector<1x2xf32>
    %cst_12 = arith.constant 1.000000e+00 : f32
    %21 = vector.broadcast %cst_12 : f32 to vector<1x2xf32>
    %22 = arith.addf %21, %20 : vector<1x2xf32>
    %23 = arith.divf %21, %22 : vector<1x2xf32>
    %c0_13 = arith.constant 0 : index
    %c0_14 = arith.constant 0 : index
    %24 = vector.load %arg4[%c0_13, %c0_14] : memref<32x2xf32, #tpu.memory_space<vmem>>, vector<32x2xf32>
    %25 = vector.broadcast %23 : vector<1x2xf32> to vector<32x2xf32>
    %26 = arith.mulf %24, %25 : vector<32x2xf32>
    %cst_15 = arith.constant dense<0.000000e+00> : vector<32xf32>
    %27 = vector.multi_reduction <add>, %26, %cst_15 [1] : vector<32x2xf32> to vector<32xf32>
    %28 = vector.shape_cast %27 : vector<32xf32> to vector<32x1xf32>
    %29 = arith.negf %28 : vector<32x1xf32>
    %30 = math.exp %29 : vector<32x1xf32>
    %cst_16 = arith.constant 1.000000e+00 : f32
    %31 = vector.broadcast %cst_16 : f32 to vector<32x1xf32>
    %32 = arith.addf %31, %30 : vector<32x1xf32>
    %33 = arith.divf %31, %32 : vector<32x1xf32>
    %c0_17 = arith.constant 0 : index
    %c0_18 = arith.constant 0 : index
    %c0_19 = arith.constant 0 : index
    %34 = vector.load %arg1[%c0_17, %c0_18, %c0_19] : memref<1x32x256xf32, #tpu.memory_space<vmem>>, vector<1x32x256xf32>
    %35 = vector.shape_cast %34 : vector<1x32x256xf32> to vector<32x256xf32>
    %36 = vector.broadcast %33 : vector<32x1xf32> to vector<32x256xf32>
    %37 = arith.mulf %35, %36 : vector<32x256xf32>
    %c0_20 = arith.constant 0 : index
    %c0_21 = arith.constant 0 : index
    %c0_22 = arith.constant 0 : index
    %38 = vector.load %arg7[%c0_20, %c0_21, %c0_22] : memref<1x32x256xf32, #tpu.memory_space<vmem>>, vector<1x32x256xf32>
    %39 = vector.shape_cast %38 : vector<1x32x256xf32> to vector<32x256xf32>
    %40 = vector.shape_cast %37 : vector<32x256xf32> to vector<1x32x256xf32>
    tpu.vector_store %arg7[%c0_20, %c0_21, %c0_22], %40 {strides = array<i32>} : memref<1x32x256xf32, #tpu.memory_space<vmem>>, vector<1x32x256xf32>,
    %c0_23 = arith.constant 0 : index
    %c0_24 = arith.constant 0 : index
    %c0_25 = arith.constant 0 : index
    %41 = vector.load %arg7[%c0_23, %c0_24, %c0_25] : memref<1x32x256xf32, #tpu.memory_space<vmem>>, vector<1x32x256xf32>
    %42 = vector.shape_cast %41 : vector<1x32x256xf32> to vector<32x256xf32>
    %cst_26 = arith.constant dense<0.000000e+00> : vector<256xf32>
    %43 = vector.multi_reduction <add>, %42, %cst_26 [0] : vector<32x256xf32> to vector<256xf32>
    %44 = vector.shape_cast %43 : vector<256xf32> to vector<1x256xf32>
    %cst_27 = arith.constant 3.200000e+01 : f32
    %45 = vector.broadcast %cst_27 : f32 to vector<1x256xf32>
    %46 = arith.divf %44, %45 : vector<1x256xf32>
    %c0_28 = arith.constant 0 : index
    %c0_29 = arith.constant 0 : index
    %c0_30 = arith.constant 0 : index
    %47 = vector.load %arg7[%c0_28, %c0_29, %c0_30] : memref<1x32x256xf32, #tpu.memory_space<vmem>>, vector<1x32x256xf32>
    %48 = vector.shape_cast %47 : vector<1x32x256xf32> to vector<32x256xf32>
    %cst_31 = arith.constant dense<0xFF800000> : vector<256xf32>
    %49 = vector.multi_reduction <maximumf>, %48, %cst_31 [0] : vector<32x256xf32> to vector<256xf32>
    %50 = vector.shape_cast %49 : vector<256xf32> to vector<1x256xf32>
    %cst_32 = arith.constant 0.000000e+00 : f32
    %51 = vector.broadcast %cst_32 : f32 to vector<2x512xf32>
    %c0_33 = arith.constant 0 : index
    %c0_34 = arith.constant 0 : index
    %52 = vector.load %arg8[%c0_33, %c0_34] : memref<2x512xf32, #tpu.memory_space<vmem>>, vector<2x512xf32>
    tpu.vector_store %arg8[%c0_33, %c0_34], %51 {strides = array<i32>} : memref<2x512xf32, #tpu.memory_space<vmem>>, vector<2x512xf32>,
    %c0_35 = arith.constant 0 : index
    %c128 = arith.constant 128 : index
    %53 = vector.load %arg8[%c0_35, %c128] : memref<2x512xf32, #tpu.memory_space<vmem>>, vector<1x256xf32>
    tpu.vector_store %arg8[%c0_35, %c128], %46 {strides = array<i32>} : memref<2x512xf32, #tpu.memory_space<vmem>>, vector<1x256xf32>,
    %c1 = arith.constant 1 : index
    %c128_36 = arith.constant 128 : index
    %54 = vector.load %arg8[%c1, %c128_36] : memref<2x512xf32, #tpu.memory_space<vmem>>, vector<1x256xf32>
    tpu.vector_store %arg8[%c1, %c128_36], %50 {strides = array<i32>} : memref<2x512xf32, #tpu.memory_space<vmem>>, vector<1x256xf32>,
    %c0_37 = arith.constant 0 : index
    %c0_38 = arith.constant 0 : index
    %55 = vector.load %arg5[%c0_37, %c0_38] : memref<7x256xf32, #tpu.memory_space<vmem>>, vector<1x256xf32>
    %c1_39 = arith.constant 1 : index
    %c0_40 = arith.constant 0 : index
    %56 = vector.load %arg5[%c1_39, %c0_40] : memref<7x256xf32, #tpu.memory_space<vmem>>, vector<1x256xf32>
    %c2 = arith.constant 2 : index
    %c0_41 = arith.constant 0 : index
    %57 = vector.load %arg5[%c2, %c0_41] : memref<7x256xf32, #tpu.memory_space<vmem>>, vector<1x256xf32>
    %c3 = arith.constant 3 : index
    %c0_42 = arith.constant 0 : index
    %58 = vector.load %arg5[%c3, %c0_42] : memref<7x256xf32, #tpu.memory_space<vmem>>, vector<1x256xf32>
    %c4 = arith.constant 4 : index
    %c0_43 = arith.constant 0 : index
    %59 = vector.load %arg5[%c4, %c0_43] : memref<7x256xf32, #tpu.memory_space<vmem>>, vector<1x256xf32>
    %c5 = arith.constant 5 : index
    %c0_44 = arith.constant 0 : index
    %60 = vector.load %arg5[%c5, %c0_44] : memref<7x256xf32, #tpu.memory_space<vmem>>, vector<1x256xf32>
    %c6 = arith.constant 6 : index
    %c0_45 = arith.constant 0 : index
    %61 = vector.load %arg5[%c6, %c0_45] : memref<7x256xf32, #tpu.memory_space<vmem>>, vector<1x256xf32>
    %c0_46 = arith.constant 0 : index
    %c77 = arith.constant 77 : index
    %62 = vector.load %arg8[%c0_46, %c77] : memref<2x512xf32, #tpu.memory_space<vmem>>, vector<2x256xf32>
    %c0_47 = arith.constant 0 : index
    %63 = memref.load %arg6[%c0_47] : memref<98xf32, #tpu.memory_space<smem>>
    %64 = vector.extract_strided_slice %62 {offsets = [0, 0], sizes = [1, 256], strides = [1, 1]} : vector<2x256xf32> to vector<1x256xf32>
    %65 = vector.broadcast %63 : f32 to vector<1x256xf32>
    %66 = arith.mulf %65, %64 : vector<1x256xf32>
    %c49 = arith.constant 49 : index
    %67 = memref.load %arg6[%c49] : memref<98xf32, #tpu.memory_space<smem>>
    %68 = vector.extract_strided_slice %62 {offsets = [1, 0], sizes = [1, 256], strides = [1, 1]} : vector<2x256xf32> to vector<1x256xf32>
    %69 = vector.broadcast %67 : f32 to vector<1x256xf32>
    %70 = arith.mulf %69, %68 : vector<1x256xf32>
    %71 = arith.addf %66, %70 : vector<1x256xf32>
    %72 = arith.mulf %71, %55 : vector<1x256xf32>
    %c0_48 = arith.constant 0 : index
    %c78 = arith.constant 78 : index
    %73 = vector.load %arg8[%c0_48, %c78] : memref<2x512xf32, #tpu.memory_space<vmem>>, vector<2x256xf32>
    %c1_49 = arith.constant 1 : index
    %74 = memref.load %arg6[%c1_49] : memref<98xf32, #tpu.memory_space<smem>>
    %75 = vector.extract_strided_slice %73 {offsets = [0, 0], sizes = [1, 256], strides = [1, 1]} : vector<2x256xf32> to vector<1x256xf32>
    %76 = vector.broadcast %74 : f32 to vector<1x256xf32>
    %77 = arith.mulf %76, %75 : vector<1x256xf32>
    %c50 = arith.constant 50 : index
    %78 = memref.load %arg6[%c50] : memref<98xf32, #tpu.memory_space<smem>>
    %79 = vector.extract_strided_slice %73 {offsets = [1, 0], sizes = [1, 256], strides = [1, 1]} : vector<2x256xf32> to vector<1x256xf32>
    %80 = vector.broadcast %78 : f32 to vector<1x256xf32>
    %81 = arith.mulf %80, %79 : vector<1x256xf32>
    %82 = arith.addf %77, %81 : vector<1x256xf32>
    %83 = arith.mulf %82, %56 : vector<1x256xf32>
    %84 = arith.addf %72, %83 : vector<1x256xf32>
    %c0_50 = arith.constant 0 : index
    %c79 = arith.constant 79 : index
    %85 = vector.load %arg8[%c0_50, %c79] : memref<2x512xf32, #tpu.memory_space<vmem>>, vector<2x256xf32>
    %c2_51 = arith.constant 2 : index
    %86 = memref.load %arg6[%c2_51] : memref<98xf32, #tpu.memory_space<smem>>
    %87 = vector.extract_strided_slice %85 {offsets = [0, 0], sizes = [1, 256], strides = [1, 1]} : vector<2x256xf32> to vector<1x256xf32>
    %88 = vector.broadcast %86 : f32 to vector<1x256xf32>
    %89 = arith.mulf %88, %87 : vector<1x256xf32>
    %c51 = arith.constant 51 : index
    %90 = memref.load %arg6[%c51] : memref<98xf32, #tpu.memory_space<smem>>
    %91 = vector.extract_strided_slice %85 {offsets = [1, 0], sizes = [1, 256], strides = [1, 1]} : vector<2x256xf32> to vector<1x256xf32>
    %92 = vector.broadcast %90 : f32 to vector<1x256xf32>
    %93 = arith.mulf %92, %91 : vector<1x256xf32>
    %94 = arith.addf %89, %93 : vector<1x256xf32>
    %95 = arith.mulf %94, %57 : vector<1x256xf32>
    %96 = arith.addf %84, %95 : vector<1x256xf32>
    %c0_52 = arith.constant 0 : index
    %c80 = arith.constant 80 : index
    %97 = vector.load %arg8[%c0_52, %c80] : memref<2x512xf32, #tpu.memory_space<vmem>>, vector<2x256xf32>
    %c3_53 = arith.constant 3 : index
    %98 = memref.load %arg6[%c3_53] : memref<98xf32, #tpu.memory_space<smem>>
    %99 = vector.extract_strided_slice %97 {offsets = [0, 0], sizes = [1, 256], strides = [1, 1]} : vector<2x256xf32> to vector<1x256xf32>
    %100 = vector.broadcast %98 : f32 to vector<1x256xf32>
    %101 = arith.mulf %100, %99 : vector<1x256xf32>
    %c52 = arith.constant 52 : index
    %102 = memref.load %arg6[%c52] : memref<98xf32, #tpu.memory_space<smem>>
    %103 = vector.extract_strided_slice %97 {offsets = [1, 0], sizes = [1, 256], strides = [1, 1]} : vector<2x256xf32> to vector<1x256xf32>
    %104 = vector.broadcast %102 : f32 to vector<1x256xf32>
    %105 = arith.mulf %104, %103 : vector<1x256xf32>
    %106 = arith.addf %101, %105 : vector<1x256xf32>
    %107 = arith.mulf %106, %58 : vector<1x256xf32>
    %108 = arith.addf %96, %107 : vector<1x256xf32>
    %c0_54 = arith.constant 0 : index
    %c81 = arith.constant 81 : index
    %109 = vector.load %arg8[%c0_54, %c81] : memref<2x512xf32, #tpu.memory_space<vmem>>, vector<2x256xf32>
    %c4_55 = arith.constant 4 : index
    %110 = memref.load %arg6[%c4_55] : memref<98xf32, #tpu.memory_space<smem>>
    %111 = vector.extract_strided_slice %109 {offsets = [0, 0], sizes = [1, 256], strides = [1, 1]} : vector<2x256xf32> to vector<1x256xf32>
    %112 = vector.broadcast %110 : f32 to vector<1x256xf32>
    %113 = arith.mulf %112, %111 : vector<1x256xf32>
    %c53 = arith.constant 53 : index
    %114 = memref.load %arg6[%c53] : memref<98xf32, #tpu.memory_space<smem>>
    %115 = vector.extract_strided_slice %109 {offsets = [1, 0], sizes = [1, 256], strides = [1, 1]} : vector<2x256xf32> to vector<1x256xf32>
    %116 = vector.broadcast %114 : f32 to vector<1x256xf32>
    %117 = arith.mulf %116, %115 : vector<1x256xf32>
    %118 = arith.addf %113, %117 : vector<1x256xf32>
    %119 = arith.mulf %118, %59 : vector<1x256xf32>
    %120 = arith.addf %108, %119 : vector<1x256xf32>
    %c0_56 = arith.constant 0 : index
    %c82 = arith.constant 82 : index
    %121 = vector.load %arg8[%c0_56, %c82] : memref<2x512xf32, #tpu.memory_space<vmem>>, vector<2x256xf32>
    %c5_57 = arith.constant 5 : index
    %122 = memref.load %arg6[%c5_57] : memref<98xf32, #tpu.memory_space<smem>>
    %123 = vector.extract_strided_slice %121 {offsets = [0, 0], sizes = [1, 256], strides = [1, 1]} : vector<2x256xf32> to vector<1x256xf32>
    %124 = vector.broadcast %122 : f32 to vector<1x256xf32>
    %125 = arith.mulf %124, %123 : vector<1x256xf32>
    %c54 = arith.constant 54 : index
    %126 = memref.load %arg6[%c54] : memref<98xf32, #tpu.memory_space<smem>>
    %127 = vector.extract_strided_slice %121 {offsets = [1, 0], sizes = [1, 256], strides = [1, 1]} : vector<2x256xf32> to vector<1x256xf32>
    %128 = vector.broadcast %126 : f32 to vector<1x256xf32>
    %129 = arith.mulf %128, %127 : vector<1x256xf32>
    %130 = arith.addf %125, %129 : vector<1x256xf32>
    %131 = arith.mulf %130, %60 : vector<1x256xf32>
    %132 = arith.addf %120, %131 : vector<1x256xf32>
    %c0_58 = arith.constant 0 : index
    %c83 = arith.constant 83 : index
    %133 = vector.load %arg8[%c0_58, %c83] : memref<2x512xf32, #tpu.memory_space<vmem>>, vector<2x256xf32>
    %c6_59 = arith.constant 6 : index
    %134 = memref.load %arg6[%c6_59] : memref<98xf32, #tpu.memory_space<smem>>
    %135 = vector.extract_strided_slice %133 {offsets = [0, 0], sizes = [1, 256], strides = [1, 1]} : vector<2x256xf32> to vector<1x256xf32>
    %136 = vector.broadcast %134 : f32 to vector<1x256xf32>
    %137 = arith.mulf %136, %135 : vector<1x256xf32>
    %c55 = arith.constant 55 : index
    %138 = memref.load %arg6[%c55] : memref<98xf32, #tpu.memory_space<smem>>
    %139 = vector.extract_strided_slice %133 {offsets = [1, 0], sizes = [1, 256], strides = [1, 1]} : vector<2x256xf32> to vector<1x256xf32>
    %140 = vector.broadcast %138 : f32 to vector<1x256xf32>
    %141 = arith.mulf %140, %139 : vector<1x256xf32>
    %142 = arith.addf %137, %141 : vector<1x256xf32>
    %143 = arith.mulf %142, %61 : vector<1x256xf32>
    %144 = arith.addf %132, %143 : vector<1x256xf32>
    %c0_60 = arith.constant 0 : index
    %c93 = arith.constant 93 : index
    %145 = vector.load %arg8[%c0_60, %c93] : memref<2x512xf32, #tpu.memory_space<vmem>>, vector<2x256xf32>
    %c7 = arith.constant 7 : index
    %146 = memref.load %arg6[%c7] : memref<98xf32, #tpu.memory_space<smem>>
    %147 = vector.extract_strided_slice %145 {offsets = [0, 0], sizes = [1, 256], strides = [1, 1]} : vector<2x256xf32> to vector<1x256xf32>
    %148 = vector.broadcast %146 : f32 to vector<1x256xf32>
    %149 = arith.mulf %148, %147 : vector<1x256xf32>
    %c56 = arith.constant 56 : index
    %150 = memref.load %arg6[%c56] : memref<98xf32, #tpu.memory_space<smem>>
    %151 = vector.extract_strided_slice %145 {offsets = [1, 0], sizes = [1, 256], strides = [1, 1]} : vector<2x256xf32> to vector<1x256xf32>
    %152 = vector.broadcast %150 : f32 to vector<1x256xf32>
    %153 = arith.mulf %152, %151 : vector<1x256xf32>
    %154 = arith.addf %149, %153 : vector<1x256xf32>
    %155 = arith.mulf %154, %55 : vector<1x256xf32>
    %156 = arith.addf %144, %155 : vector<1x256xf32>
    %c0_61 = arith.constant 0 : index
    %c94 = arith.constant 94 : index
    %157 = vector.load %arg8[%c0_61, %c94] : memref<2x512xf32, #tpu.memory_space<vmem>>, vector<2x256xf32>
    %c8 = arith.constant 8 : index
    %158 = memref.load %arg6[%c8] : memref<98xf32, #tpu.memory_space<smem>>
    %159 = vector.extract_strided_slice %157 {offsets = [0, 0], sizes = [1, 256], strides = [1, 1]} : vector<2x256xf32> to vector<1x256xf32>
    %160 = vector.broadcast %158 : f32 to vector<1x256xf32>
    %161 = arith.mulf %160, %159 : vector<1x256xf32>
    %c57 = arith.constant 57 : index
    %162 = memref.load %arg6[%c57] : memref<98xf32, #tpu.memory_space<smem>>
    %163 = vector.extract_strided_slice %157 {offsets = [1, 0], sizes = [1, 256], strides = [1, 1]} : vector<2x256xf32> to vector<1x256xf32>
    %164 = vector.broadcast %162 : f32 to vector<1x256xf32>
    %165 = arith.mulf %164, %163 : vector<1x256xf32>
    %166 = arith.addf %161, %165 : vector<1x256xf32>
    %167 = arith.mulf %166, %56 : vector<1x256xf32>
    %168 = arith.addf %156, %167 : vector<1x256xf32>
    %c0_62 = arith.constant 0 : index
    %c95 = arith.constant 95 : index
    %169 = vector.load %arg8[%c0_62, %c95] : memref<2x512xf32, #tpu.memory_space<vmem>>, vector<2x256xf32>
    %c9 = arith.constant 9 : index
    %170 = memref.load %arg6[%c9] : memref<98xf32, #tpu.memory_space<smem>>
    %171 = vector.extract_strided_slice %169 {offsets = [0, 0], sizes = [1, 256], strides = [1, 1]} : vector<2x256xf32> to vector<1x256xf32>
    %172 = vector.broadcast %170 : f32 to vector<1x256xf32>
    %173 = arith.mulf %172, %171 : vector<1x256xf32>
    %c58 = arith.constant 58 : index
    %174 = memref.load %arg6[%c58] : memref<98xf32, #tpu.memory_space<smem>>
    %175 = vector.extract_strided_slice %169 {offsets = [1, 0], sizes = [1, 256], strides = [1, 1]} : vector<2x256xf32> to vector<1x256xf32>
    %176 = vector.broadcast %174 : f32 to vector<1x256xf32>
    %177 = arith.mulf %176, %175 : vector<1x256xf32>
    %178 = arith.addf %173, %177 : vector<1x256xf32>
    %179 = arith.mulf %178, %57 : vector<1x256xf32>
    %180 = arith.addf %168, %179 : vector<1x256xf32>
    %c0_63 = arith.constant 0 : index
    %c96 = arith.constant 96 : index
    %181 = vector.load %arg8[%c0_63, %c96] : memref<2x512xf32, #tpu.memory_space<vmem>>, vector<2x256xf32>
    %c10 = arith.constant 10 : index
    %182 = memref.load %arg6[%c10] : memref<98xf32, #tpu.memory_space<smem>>
    %183 = vector.extract_strided_slice %181 {offsets = [0, 0], sizes = [1, 256], strides = [1, 1]} : vector<2x256xf32> to vector<1x256xf32>
    %184 = vector.broadcast %182 : f32 to vector<1x256xf32>
    %185 = arith.mulf %184, %183 : vector<1x256xf32>
    %c59 = arith.constant 59 : index
    %186 = memref.load %arg6[%c59] : memref<98xf32, #tpu.memory_space<smem>>
    %187 = vector.extract_strided_slice %181 {offsets = [1, 0], sizes = [1, 256], strides = [1, 1]} : vector<2x256xf32> to vector<1x256xf32>
    %188 = vector.broadcast %186 : f32 to vector<1x256xf32>
    %189 = arith.mulf %188, %187 : vector<1x256xf32>
    %190 = arith.addf %185, %189 : vector<1x256xf32>
    %191 = arith.mulf %190, %58 : vector<1x256xf32>
    %192 = arith.addf %180, %191 : vector<1x256xf32>
    %c0_64 = arith.constant 0 : index
    %c97 = arith.constant 97 : index
    %193 = vector.load %arg8[%c0_64, %c97] : memref<2x512xf32, #tpu.memory_space<vmem>>, vector<2x256xf32>
    %c11 = arith.constant 11 : index
    %194 = memref.load %arg6[%c11] : memref<98xf32, #tpu.memory_space<smem>>
    %195 = vector.extract_strided_slice %193 {offsets = [0, 0], sizes = [1, 256], strides = [1, 1]} : vector<2x256xf32> to vector<1x256xf32>
    %196 = vector.broadcast %194 : f32 to vector<1x256xf32>
    %197 = arith.mulf %196, %195 : vector<1x256xf32>
    %c60 = arith.constant 60 : index
    %198 = memref.load %arg6[%c60] : memref<98xf32, #tpu.memory_space<smem>>
    %199 = vector.extract_strided_slice %193 {offsets = [1, 0], sizes = [1, 256], strides = [1, 1]} : vector<2x256xf32> to vector<1x256xf32>
    %200 = vector.broadcast %198 : f32 to vector<1x256xf32>
    %201 = arith.mulf %200, %199 : vector<1x256xf32>
    %202 = arith.addf %197, %201 : vector<1x256xf32>
    %203 = arith.mulf %202, %59 : vector<1x256xf32>
    %204 = arith.addf %192, %203 : vector<1x256xf32>
    %c0_65 = arith.constant 0 : index
    %c98 = arith.constant 98 : index
    %205 = vector.load %arg8[%c0_65, %c98] : memref<2x512xf32, #tpu.memory_space<vmem>>, vector<2x256xf32>
    %c12 = arith.constant 12 : index
    %206 = memref.load %arg6[%c12] : memref<98xf32, #tpu.memory_space<smem>>
    %207 = vector.extract_strided_slice %205 {offsets = [0, 0], sizes = [1, 256], strides = [1, 1]} : vector<2x256xf32> to vector<1x256xf32>
    %208 = vector.broadcast %206 : f32 to vector<1x256xf32>
    %209 = arith.mulf %208, %207 : vector<1x256xf32>
    %c61 = arith.constant 61 : index
    %210 = memref.load %arg6[%c61] : memref<98xf32, #tpu.memory_space<smem>>
    %211 = vector.extract_strided_slice %205 {offsets = [1, 0], sizes = [1, 256], strides = [1, 1]} : vector<2x256xf32> to vector<1x256xf32>
    %212 = vector.broadcast %210 : f32 to vector<1x256xf32>
    %213 = arith.mulf %212, %211 : vector<1x256xf32>
    %214 = arith.addf %209, %213 : vector<1x256xf32>
    %215 = arith.mulf %214, %60 : vector<1x256xf32>
    %216 = arith.addf %204, %215 : vector<1x256xf32>
    %c0_66 = arith.constant 0 : index
    %c99 = arith.constant 99 : index
    %217 = vector.load %arg8[%c0_66, %c99] : memref<2x512xf32, #tpu.memory_space<vmem>>, vector<2x256xf32>
    %c13 = arith.constant 13 : index
    %218 = memref.load %arg6[%c13] : memref<98xf32, #tpu.memory_space<smem>>
    %219 = vector.extract_strided_slice %217 {offsets = [0, 0], sizes = [1, 256], strides = [1, 1]} : vector<2x256xf32> to vector<1x256xf32>
    %220 = vector.broadcast %218 : f32 to vector<1x256xf32>
    %221 = arith.mulf %220, %219 : vector<1x256xf32>
    %c62 = arith.constant 62 : index
    %222 = memref.load %arg6[%c62] : memref<98xf32, #tpu.memory_space<smem>>
    %223 = vector.extract_strided_slice %217 {offsets = [1, 0], sizes = [1, 256], strides = [1, 1]} : vector<2x256xf32> to vector<1x256xf32>
    %224 = vector.broadcast %222 : f32 to vector<1x256xf32>
    %225 = arith.mulf %224, %223 : vector<1x256xf32>
    %226 = arith.addf %221, %225 : vector<1x256xf32>
    %227 = arith.mulf %226, %61 : vector<1x256xf32>
    %228 = arith.addf %216, %227 : vector<1x256xf32>
    %c0_67 = arith.constant 0 : index
    %c109 = arith.constant 109 : index
    %229 = vector.load %arg8[%c0_67, %c109] : memref<2x512xf32, #tpu.memory_space<vmem>>, vector<2x256xf32>
    %c14 = arith.constant 14 : index
    %230 = memref.load %arg6[%c14] : memref<98xf32, #tpu.memory_space<smem>>
    %231 = vector.extract_strided_slice %229 {offsets = [0, 0], sizes = [1, 256], strides = [1, 1]} : vector<2x256xf32> to vector<1x256xf32>
    %232 = vector.broadcast %230 : f32 to vector<1x256xf32>
    %233 = arith.mulf %232, %231 : vector<1x256xf32>
    %c63 = arith.constant 63 : index
    %234 = memref.load %arg6[%c63] : memref<98xf32, #tpu.memory_space<smem>>
    %235 = vector.extract_strided_slice %229 {offsets = [1, 0], sizes = [1, 256], strides = [1, 1]} : vector<2x256xf32> to vector<1x256xf32>
    %236 = vector.broadcast %234 : f32 to vector<1x256xf32>
    %237 = arith.mulf %236, %235 : vector<1x256xf32>
    %238 = arith.addf %233, %237 : vector<1x256xf32>
    %239 = arith.mulf %238, %55 : vector<1x256xf32>
    %240 = arith.addf %228, %239 : vector<1x256xf32>
    %c0_68 = arith.constant 0 : index
    %c110 = arith.constant 110 : index
    %241 = vector.load %arg8[%c0_68, %c110] : memref<2x512xf32, #tpu.memory_space<vmem>>, vector<2x256xf32>
    %c15 = arith.constant 15 : index
    %242 = memref.load %arg6[%c15] : memref<98xf32, #tpu.memory_space<smem>>
    %243 = vector.extract_strided_slice %241 {offsets = [0, 0], sizes = [1, 256], strides = [1, 1]} : vector<2x256xf32> to vector<1x256xf32>
    %244 = vector.broadcast %242 : f32 to vector<1x256xf32>
    %245 = arith.mulf %244, %243 : vector<1x256xf32>
    %c64 = arith.constant 64 : index
    %246 = memref.load %arg6[%c64] : memref<98xf32, #tpu.memory_space<smem>>
    %247 = vector.extract_strided_slice %241 {offsets = [1, 0], sizes = [1, 256], strides = [1, 1]} : vector<2x256xf32> to vector<1x256xf32>
    %248 = vector.broadcast %246 : f32 to vector<1x256xf32>
    %249 = arith.mulf %248, %247 : vector<1x256xf32>
    %250 = arith.addf %245, %249 : vector<1x256xf32>
    %251 = arith.mulf %250, %56 : vector<1x256xf32>
    %252 = arith.addf %240, %251 : vector<1x256xf32>
    %c0_69 = arith.constant 0 : index
    %c111 = arith.constant 111 : index
    %253 = vector.load %arg8[%c0_69, %c111] : memref<2x512xf32, #tpu.memory_space<vmem>>, vector<2x256xf32>
    %c16 = arith.constant 16 : index
    %254 = memref.load %arg6[%c16] : memref<98xf32, #tpu.memory_space<smem>>
    %255 = vector.extract_strided_slice %253 {offsets = [0, 0], sizes = [1, 256], strides = [1, 1]} : vector<2x256xf32> to vector<1x256xf32>
    %256 = vector.broadcast %254 : f32 to vector<1x256xf32>
    %257 = arith.mulf %256, %255 : vector<1x256xf32>
    %c65 = arith.constant 65 : index
    %258 = memref.load %arg6[%c65] : memref<98xf32, #tpu.memory_space<smem>>
    %259 = vector.extract_strided_slice %253 {offsets = [1, 0], sizes = [1, 256], strides = [1, 1]} : vector<2x256xf32> to vector<1x256xf32>
    %260 = vector.broadcast %258 : f32 to vector<1x256xf32>
    %261 = arith.mulf %260, %259 : vector<1x256xf32>
    %262 = arith.addf %257, %261 : vector<1x256xf32>
    %263 = arith.mulf %262, %57 : vector<1x256xf32>
    %264 = arith.addf %252, %263 : vector<1x256xf32>
    %c0_70 = arith.constant 0 : index
    %c112 = arith.constant 112 : index
    %265 = vector.load %arg8[%c0_70, %c112] : memref<2x512xf32, #tpu.memory_space<vmem>>, vector<2x256xf32>
    %c17 = arith.constant 17 : index
    %266 = memref.load %arg6[%c17] : memref<98xf32, #tpu.memory_space<smem>>
    %267 = vector.extract_strided_slice %265 {offsets = [0, 0], sizes = [1, 256], strides = [1, 1]} : vector<2x256xf32> to vector<1x256xf32>
    %268 = vector.broadcast %266 : f32 to vector<1x256xf32>
    %269 = arith.mulf %268, %267 : vector<1x256xf32>
    %c66 = arith.constant 66 : index
    %270 = memref.load %arg6[%c66] : memref<98xf32, #tpu.memory_space<smem>>
    %271 = vector.extract_strided_slice %265 {offsets = [1, 0], sizes = [1, 256], strides = [1, 1]} : vector<2x256xf32> to vector<1x256xf32>
    %272 = vector.broadcast %270 : f32 to vector<1x256xf32>
    %273 = arith.mulf %272, %271 : vector<1x256xf32>
    %274 = arith.addf %269, %273 : vector<1x256xf32>
    %275 = arith.mulf %274, %58 : vector<1x256xf32>
    %276 = arith.addf %264, %275 : vector<1x256xf32>
    %c0_71 = arith.constant 0 : index
    %c113 = arith.constant 113 : index
    %277 = vector.load %arg8[%c0_71, %c113] : memref<2x512xf32, #tpu.memory_space<vmem>>, vector<2x256xf32>
    %c18 = arith.constant 18 : index
    %278 = memref.load %arg6[%c18] : memref<98xf32, #tpu.memory_space<smem>>
    %279 = vector.extract_strided_slice %277 {offsets = [0, 0], sizes = [1, 256], strides = [1, 1]} : vector<2x256xf32> to vector<1x256xf32>
    %280 = vector.broadcast %278 : f32 to vector<1x256xf32>
    %281 = arith.mulf %280, %279 : vector<1x256xf32>
    %c67 = arith.constant 67 : index
    %282 = memref.load %arg6[%c67] : memref<98xf32, #tpu.memory_space<smem>>
    %283 = vector.extract_strided_slice %277 {offsets = [1, 0], sizes = [1, 256], strides = [1, 1]} : vector<2x256xf32> to vector<1x256xf32>
    %284 = vector.broadcast %282 : f32 to vector<1x256xf32>
    %285 = arith.mulf %284, %283 : vector<1x256xf32>
    %286 = arith.addf %281, %285 : vector<1x256xf32>
    %287 = arith.mulf %286, %59 : vector<1x256xf32>
    %288 = arith.addf %276, %287 : vector<1x256xf32>
    %c0_72 = arith.constant 0 : index
    %c114 = arith.constant 114 : index
    %289 = vector.load %arg8[%c0_72, %c114] : memref<2x512xf32, #tpu.memory_space<vmem>>, vector<2x256xf32>
    %c19 = arith.constant 19 : index
    %290 = memref.load %arg6[%c19] : memref<98xf32, #tpu.memory_space<smem>>
    %291 = vector.extract_strided_slice %289 {offsets = [0, 0], sizes = [1, 256], strides = [1, 1]} : vector<2x256xf32> to vector<1x256xf32>
    %292 = vector.broadcast %290 : f32 to vector<1x256xf32>
    %293 = arith.mulf %292, %291 : vector<1x256xf32>
    %c68 = arith.constant 68 : index
    %294 = memref.load %arg6[%c68] : memref<98xf32, #tpu.memory_space<smem>>
    %295 = vector.extract_strided_slice %289 {offsets = [1, 0], sizes = [1, 256], strides = [1, 1]} : vector<2x256xf32> to vector<1x256xf32>
    %296 = vector.broadcast %294 : f32 to vector<1x256xf32>
    %297 = arith.mulf %296, %295 : vector<1x256xf32>
    %298 = arith.addf %293, %297 : vector<1x256xf32>
    %299 = arith.mulf %298, %60 : vector<1x256xf32>
    %300 = arith.addf %288, %299 : vector<1x256xf32>
    %c0_73 = arith.constant 0 : index
    %c115 = arith.constant 115 : index
    %301 = vector.load %arg8[%c0_73, %c115] : memref<2x512xf32, #tpu.memory_space<vmem>>, vector<2x256xf32>
    %c20 = arith.constant 20 : index
    %302 = memref.load %arg6[%c20] : memref<98xf32, #tpu.memory_space<smem>>
    %303 = vector.extract_strided_slice %301 {offsets = [0, 0], sizes = [1, 256], strides = [1, 1]} : vector<2x256xf32> to vector<1x256xf32>
    %304 = vector.broadcast %302 : f32 to vector<1x256xf32>
    %305 = arith.mulf %304, %303 : vector<1x256xf32>
    %c69 = arith.constant 69 : index
    %306 = memref.load %arg6[%c69] : memref<98xf32, #tpu.memory_space<smem>>
    %307 = vector.extract_strided_slice %301 {offsets = [1, 0], sizes = [1, 256], strides = [1, 1]} : vector<2x256xf32> to vector<1x256xf32>
    %308 = vector.broadcast %306 : f32 to vector<1x256xf32>
    %309 = arith.mulf %308, %307 : vector<1x256xf32>
    %310 = arith.addf %305, %309 : vector<1x256xf32>
    %311 = arith.mulf %310, %61 : vector<1x256xf32>
    %312 = arith.addf %300, %311 : vector<1x256xf32>
    %c0_74 = arith.constant 0 : index
    %c125 = arith.constant 125 : index
    %313 = vector.load %arg8[%c0_74, %c125] : memref<2x512xf32, #tpu.memory_space<vmem>>, vector<2x256xf32>
    %c21 = arith.constant 21 : index
    %314 = memref.load %arg6[%c21] : memref<98xf32, #tpu.memory_space<smem>>
    %315 = vector.extract_strided_slice %313 {offsets = [0, 0], sizes = [1, 256], strides = [1, 1]} : vector<2x256xf32> to vector<1x256xf32>
    %316 = vector.broadcast %314 : f32 to vector<1x256xf32>
    %317 = arith.mulf %316, %315 : vector<1x256xf32>
    %c70 = arith.constant 70 : index
    %318 = memref.load %arg6[%c70] : memref<98xf32, #tpu.memory_space<smem>>
    %319 = vector.extract_strided_slice %313 {offsets = [1, 0], sizes = [1, 256], strides = [1, 1]} : vector<2x256xf32> to vector<1x256xf32>
    %320 = vector.broadcast %318 : f32 to vector<1x256xf32>
    %321 = arith.mulf %320, %319 : vector<1x256xf32>
    %322 = arith.addf %317, %321 : vector<1x256xf32>
    %323 = arith.mulf %322, %55 : vector<1x256xf32>
    %324 = arith.addf %312, %323 : vector<1x256xf32>
    %c0_75 = arith.constant 0 : index
    %c126 = arith.constant 126 : index
    %325 = vector.load %arg8[%c0_75, %c126] : memref<2x512xf32, #tpu.memory_space<vmem>>, vector<2x256xf32>
    %c22 = arith.constant 22 : index
    %326 = memref.load %arg6[%c22] : memref<98xf32, #tpu.memory_space<smem>>
    %327 = vector.extract_strided_slice %325 {offsets = [0, 0], sizes = [1, 256], strides = [1, 1]} : vector<2x256xf32> to vector<1x256xf32>
    %328 = vector.broadcast %326 : f32 to vector<1x256xf32>
    %329 = arith.mulf %328, %327 : vector<1x256xf32>
    %c71 = arith.constant 71 : index
    %330 = memref.load %arg6[%c71] : memref<98xf32, #tpu.memory_space<smem>>
    %331 = vector.extract_strided_slice %325 {offsets = [1, 0], sizes = [1, 256], strides = [1, 1]} : vector<2x256xf32> to vector<1x256xf32>
    %332 = vector.broadcast %330 : f32 to vector<1x256xf32>
    %333 = arith.mulf %332, %331 : vector<1x256xf32>
    %334 = arith.addf %329, %333 : vector<1x256xf32>
    %335 = arith.mulf %334, %56 : vector<1x256xf32>
    %336 = arith.addf %324, %335 : vector<1x256xf32>
    %c0_76 = arith.constant 0 : index
    %c127 = arith.constant 127 : index
    %337 = vector.load %arg8[%c0_76, %c127] : memref<2x512xf32, #tpu.memory_space<vmem>>, vector<2x256xf32>
    %c23 = arith.constant 23 : index
    %338 = memref.load %arg6[%c23] : memref<98xf32, #tpu.memory_space<smem>>
    %339 = vector.extract_strided_slice %337 {offsets = [0, 0], sizes = [1, 256], strides = [1, 1]} : vector<2x256xf32> to vector<1x256xf32>
    %340 = vector.broadcast %338 : f32 to vector<1x256xf32>
    %341 = arith.mulf %340, %339 : vector<1x256xf32>
    %c72 = arith.constant 72 : index
    %342 = memref.load %arg6[%c72] : memref<98xf32, #tpu.memory_space<smem>>
    %343 = vector.extract_strided_slice %337 {offsets = [1, 0], sizes = [1, 256], strides = [1, 1]} : vector<2x256xf32> to vector<1x256xf32>
    %344 = vector.broadcast %342 : f32 to vector<1x256xf32>
    %345 = arith.mulf %344, %343 : vector<1x256xf32>
    %346 = arith.addf %341, %345 : vector<1x256xf32>
    %347 = arith.mulf %346, %57 : vector<1x256xf32>
    %348 = arith.addf %336, %347 : vector<1x256xf32>
    %c0_77 = arith.constant 0 : index
    %c128_78 = arith.constant 128 : index
    %349 = vector.load %arg8[%c0_77, %c128_78] : memref<2x512xf32, #tpu.memory_space<vmem>>, vector<2x256xf32>
    %c24 = arith.constant 24 : index
    %350 = memref.load %arg6[%c24] : memref<98xf32, #tpu.memory_space<smem>>
    %351 = vector.extract_strided_slice %349 {offsets = [0, 0], sizes = [1, 256], strides = [1, 1]} : vector<2x256xf32> to vector<1x256xf32>
    %352 = vector.broadcast %350 : f32 to vector<1x256xf32>
    %353 = arith.mulf %352, %351 : vector<1x256xf32>
    %c73 = arith.constant 73 : index
    %354 = memref.load %arg6[%c73] : memref<98xf32, #tpu.memory_space<smem>>
    %355 = vector.extract_strided_slice %349 {offsets = [1, 0], sizes = [1, 256], strides = [1, 1]} : vector<2x256xf32> to vector<1x256xf32>
    %356 = vector.broadcast %354 : f32 to vector<1x256xf32>
    %357 = arith.mulf %356, %355 : vector<1x256xf32>
    %358 = arith.addf %353, %357 : vector<1x256xf32>
    %359 = arith.mulf %358, %58 : vector<1x256xf32>
    %360 = arith.addf %348, %359 : vector<1x256xf32>
    %c0_79 = arith.constant 0 : index
    %c129 = arith.constant 129 : index
    %361 = vector.load %arg8[%c0_79, %c129] : memref<2x512xf32, #tpu.memory_space<vmem>>, vector<2x256xf32>
    %c25 = arith.constant 25 : index
    %362 = memref.load %arg6[%c25] : memref<98xf32, #tpu.memory_space<smem>>
    %363 = vector.extract_strided_slice %361 {offsets = [0, 0], sizes = [1, 256], strides = [1, 1]} : vector<2x256xf32> to vector<1x256xf32>
    %364 = vector.broadcast %362 : f32 to vector<1x256xf32>
    %365 = arith.mulf %364, %363 : vector<1x256xf32>
    %c74 = arith.constant 74 : index
    %366 = memref.load %arg6[%c74] : memref<98xf32, #tpu.memory_space<smem>>
    %367 = vector.extract_strided_slice %361 {offsets = [1, 0], sizes = [1, 256], strides = [1, 1]} : vector<2x256xf32> to vector<1x256xf32>
    %368 = vector.broadcast %366 : f32 to vector<1x256xf32>
    %369 = arith.mulf %368, %367 : vector<1x256xf32>
    %370 = arith.addf %365, %369 : vector<1x256xf32>
    %371 = arith.mulf %370, %59 : vector<1x256xf32>
    %372 = arith.addf %360, %371 : vector<1x256xf32>
    %c0_80 = arith.constant 0 : index
    %c130 = arith.constant 130 : index
    %373 = vector.load %arg8[%c0_80, %c130] : memref<2x512xf32, #tpu.memory_space<vmem>>, vector<2x256xf32>
    %c26 = arith.constant 26 : index
    %374 = memref.load %arg6[%c26] : memref<98xf32, #tpu.memory_space<smem>>
    %375 = vector.extract_strided_slice %373 {offsets = [0, 0], sizes = [1, 256], strides = [1, 1]} : vector<2x256xf32> to vector<1x256xf32>
    %376 = vector.broadcast %374 : f32 to vector<1x256xf32>
    %377 = arith.mulf %376, %375 : vector<1x256xf32>
    %c75 = arith.constant 75 : index
    %378 = memref.load %arg6[%c75] : memref<98xf32, #tpu.memory_space<smem>>
    %379 = vector.extract_strided_slice %373 {offsets = [1, 0], sizes = [1, 256], strides = [1, 1]} : vector<2x256xf32> to vector<1x256xf32>
    %380 = vector.broadcast %378 : f32 to vector<1x256xf32>
    %381 = arith.mulf %380, %379 : vector<1x256xf32>
    %382 = arith.addf %377, %381 : vector<1x256xf32>
    %383 = arith.mulf %382, %60 : vector<1x256xf32>
    %384 = arith.addf %372, %383 : vector<1x256xf32>
    %c0_81 = arith.constant 0 : index
    %c131 = arith.constant 131 : index
    %385 = vector.load %arg8[%c0_81, %c131] : memref<2x512xf32, #tpu.memory_space<vmem>>, vector<2x256xf32>
    %c27 = arith.constant 27 : index
    %386 = memref.load %arg6[%c27] : memref<98xf32, #tpu.memory_space<smem>>
    %387 = vector.extract_strided_slice %385 {offsets = [0, 0], sizes = [1, 256], strides = [1, 1]} : vector<2x256xf32> to vector<1x256xf32>
    %388 = vector.broadcast %386 : f32 to vector<1x256xf32>
    %389 = arith.mulf %388, %387 : vector<1x256xf32>
    %c76 = arith.constant 76 : index
    %390 = memref.load %arg6[%c76] : memref<98xf32, #tpu.memory_space<smem>>
    %391 = vector.extract_strided_slice %385 {offsets = [1, 0], sizes = [1, 256], strides = [1, 1]} : vector<2x256xf32> to vector<1x256xf32>
    %392 = vector.broadcast %390 : f32 to vector<1x256xf32>
    %393 = arith.mulf %392, %391 : vector<1x256xf32>
    %394 = arith.addf %389, %393 : vector<1x256xf32>
    %395 = arith.mulf %394, %61 : vector<1x256xf32>
    %396 = arith.addf %384, %395 : vector<1x256xf32>
    %c0_82 = arith.constant 0 : index
    %c141 = arith.constant 141 : index
    %397 = vector.load %arg8[%c0_82, %c141] : memref<2x512xf32, #tpu.memory_space<vmem>>, vector<2x256xf32>
    %c28 = arith.constant 28 : index
    %398 = memref.load %arg6[%c28] : memref<98xf32, #tpu.memory_space<smem>>
    %399 = vector.extract_strided_slice %397 {offsets = [0, 0], sizes = [1, 256], strides = [1, 1]} : vector<2x256xf32> to vector<1x256xf32>
    %400 = vector.broadcast %398 : f32 to vector<1x256xf32>
    %401 = arith.mulf %400, %399 : vector<1x256xf32>
    %c77_83 = arith.constant 77 : index
    %402 = memref.load %arg6[%c77_83] : memref<98xf32, #tpu.memory_space<smem>>
    %403 = vector.extract_strided_slice %397 {offsets = [1, 0], sizes = [1, 256], strides = [1, 1]} : vector<2x256xf32> to vector<1x256xf32>
    %404 = vector.broadcast %402 : f32 to vector<1x256xf32>
    %405 = arith.mulf %404, %403 : vector<1x256xf32>
    %406 = arith.addf %401, %405 : vector<1x256xf32>
    %407 = arith.mulf %406, %55 : vector<1x256xf32>
    %408 = arith.addf %396, %407 : vector<1x256xf32>
    %c0_84 = arith.constant 0 : index
    %c142 = arith.constant 142 : index
    %409 = vector.load %arg8[%c0_84, %c142] : memref<2x512xf32, #tpu.memory_space<vmem>>, vector<2x256xf32>
    %c29 = arith.constant 29 : index
    %410 = memref.load %arg6[%c29] : memref<98xf32, #tpu.memory_space<smem>>
    %411 = vector.extract_strided_slice %409 {offsets = [0, 0], sizes = [1, 256], strides = [1, 1]} : vector<2x256xf32> to vector<1x256xf32>
    %412 = vector.broadcast %410 : f32 to vector<1x256xf32>
    %413 = arith.mulf %412, %411 : vector<1x256xf32>
    %c78_85 = arith.constant 78 : index
    %414 = memref.load %arg6[%c78_85] : memref<98xf32, #tpu.memory_space<smem>>
    %415 = vector.extract_strided_slice %409 {offsets = [1, 0], sizes = [1, 256], strides = [1, 1]} : vector<2x256xf32> to vector<1x256xf32>
    %416 = vector.broadcast %414 : f32 to vector<1x256xf32>
    %417 = arith.mulf %416, %415 : vector<1x256xf32>
    %418 = arith.addf %413, %417 : vector<1x256xf32>
    %419 = arith.mulf %418, %56 : vector<1x256xf32>
    %420 = arith.addf %408, %419 : vector<1x256xf32>
    %c0_86 = arith.constant 0 : index
    %c143 = arith.constant 143 : index
    %421 = vector.load %arg8[%c0_86, %c143] : memref<2x512xf32, #tpu.memory_space<vmem>>, vector<2x256xf32>
    %c30 = arith.constant 30 : index
    %422 = memref.load %arg6[%c30] : memref<98xf32, #tpu.memory_space<smem>>
    %423 = vector.extract_strided_slice %421 {offsets = [0, 0], sizes = [1, 256], strides = [1, 1]} : vector<2x256xf32> to vector<1x256xf32>
    %424 = vector.broadcast %422 : f32 to vector<1x256xf32>
    %425 = arith.mulf %424, %423 : vector<1x256xf32>
    %c79_87 = arith.constant 79 : index
    %426 = memref.load %arg6[%c79_87] : memref<98xf32, #tpu.memory_space<smem>>
    %427 = vector.extract_strided_slice %421 {offsets = [1, 0], sizes = [1, 256], strides = [1, 1]} : vector<2x256xf32> to vector<1x256xf32>
    %428 = vector.broadcast %426 : f32 to vector<1x256xf32>
    %429 = arith.mulf %428, %427 : vector<1x256xf32>
    %430 = arith.addf %425, %429 : vector<1x256xf32>
    %431 = arith.mulf %430, %57 : vector<1x256xf32>
    %432 = arith.addf %420, %431 : vector<1x256xf32>
    %c0_88 = arith.constant 0 : index
    %c144 = arith.constant 144 : index
    %433 = vector.load %arg8[%c0_88, %c144] : memref<2x512xf32, #tpu.memory_space<vmem>>, vector<2x256xf32>
    %c31 = arith.constant 31 : index
    %434 = memref.load %arg6[%c31] : memref<98xf32, #tpu.memory_space<smem>>
    %435 = vector.extract_strided_slice %433 {offsets = [0, 0], sizes = [1, 256], strides = [1, 1]} : vector<2x256xf32> to vector<1x256xf32>
    %436 = vector.broadcast %434 : f32 to vector<1x256xf32>
    %437 = arith.mulf %436, %435 : vector<1x256xf32>
    %c80_89 = arith.constant 80 : index
    %438 = memref.load %arg6[%c80_89] : memref<98xf32, #tpu.memory_space<smem>>
    %439 = vector.extract_strided_slice %433 {offsets = [1, 0], sizes = [1, 256], strides = [1, 1]} : vector<2x256xf32> to vector<1x256xf32>
    %440 = vector.broadcast %438 : f32 to vector<1x256xf32>
    %441 = arith.mulf %440, %439 : vector<1x256xf32>
    %442 = arith.addf %437, %441 : vector<1x256xf32>
    %443 = arith.mulf %442, %58 : vector<1x256xf32>
    %444 = arith.addf %432, %443 : vector<1x256xf32>
    %c0_90 = arith.constant 0 : index
    %c145 = arith.constant 145 : index
    %445 = vector.load %arg8[%c0_90, %c145] : memref<2x512xf32, #tpu.memory_space<vmem>>, vector<2x256xf32>
    %c32 = arith.constant 32 : index
    %446 = memref.load %arg6[%c32] : memref<98xf32, #tpu.memory_space<smem>>
    %447 = vector.extract_strided_slice %445 {offsets = [0, 0], sizes = [1, 256], strides = [1, 1]} : vector<2x256xf32> to vector<1x256xf32>
    %448 = vector.broadcast %446 : f32 to vector<1x256xf32>
    %449 = arith.mulf %448, %447 : vector<1x256xf32>
    %c81_91 = arith.constant 81 : index
    %450 = memref.load %arg6[%c81_91] : memref<98xf32, #tpu.memory_space<smem>>
    %451 = vector.extract_strided_slice %445 {offsets = [1, 0], sizes = [1, 256], strides = [1, 1]} : vector<2x256xf32> to vector<1x256xf32>
    %452 = vector.broadcast %450 : f32 to vector<1x256xf32>
    %453 = arith.mulf %452, %451 : vector<1x256xf32>
    %454 = arith.addf %449, %453 : vector<1x256xf32>
    %455 = arith.mulf %454, %59 : vector<1x256xf32>
    %456 = arith.addf %444, %455 : vector<1x256xf32>
    %c0_92 = arith.constant 0 : index
    %c146 = arith.constant 146 : index
    %457 = vector.load %arg8[%c0_92, %c146] : memref<2x512xf32, #tpu.memory_space<vmem>>, vector<2x256xf32>
    %c33 = arith.constant 33 : index
    %458 = memref.load %arg6[%c33] : memref<98xf32, #tpu.memory_space<smem>>
    %459 = vector.extract_strided_slice %457 {offsets = [0, 0], sizes = [1, 256], strides = [1, 1]} : vector<2x256xf32> to vector<1x256xf32>
    %460 = vector.broadcast %458 : f32 to vector<1x256xf32>
    %461 = arith.mulf %460, %459 : vector<1x256xf32>
    %c82_93 = arith.constant 82 : index
    %462 = memref.load %arg6[%c82_93] : memref<98xf32, #tpu.memory_space<smem>>
    %463 = vector.extract_strided_slice %457 {offsets = [1, 0], sizes = [1, 256], strides = [1, 1]} : vector<2x256xf32> to vector<1x256xf32>
    %464 = vector.broadcast %462 : f32 to vector<1x256xf32>
    %465 = arith.mulf %464, %463 : vector<1x256xf32>
    %466 = arith.addf %461, %465 : vector<1x256xf32>
    %467 = arith.mulf %466, %60 : vector<1x256xf32>
    %468 = arith.addf %456, %467 : vector<1x256xf32>
    %c0_94 = arith.constant 0 : index
    %c147 = arith.constant 147 : index
    %469 = vector.load %arg8[%c0_94, %c147] : memref<2x512xf32, #tpu.memory_space<vmem>>, vector<2x256xf32>
    %c34 = arith.constant 34 : index
    %470 = memref.load %arg6[%c34] : memref<98xf32, #tpu.memory_space<smem>>
    %471 = vector.extract_strided_slice %469 {offsets = [0, 0], sizes = [1, 256], strides = [1, 1]} : vector<2x256xf32> to vector<1x256xf32>
    %472 = vector.broadcast %470 : f32 to vector<1x256xf32>
    %473 = arith.mulf %472, %471 : vector<1x256xf32>
    %c83_95 = arith.constant 83 : index
    %474 = memref.load %arg6[%c83_95] : memref<98xf32, #tpu.memory_space<smem>>
    %475 = vector.extract_strided_slice %469 {offsets = [1, 0], sizes = [1, 256], strides = [1, 1]} : vector<2x256xf32> to vector<1x256xf32>
    %476 = vector.broadcast %474 : f32 to vector<1x256xf32>
    %477 = arith.mulf %476, %475 : vector<1x256xf32>
    %478 = arith.addf %473, %477 : vector<1x256xf32>
    %479 = arith.mulf %478, %61 : vector<1x256xf32>
    %480 = arith.addf %468, %479 : vector<1x256xf32>
    %c0_96 = arith.constant 0 : index
    %c157 = arith.constant 157 : index
    %481 = vector.load %arg8[%c0_96, %c157] : memref<2x512xf32, #tpu.memory_space<vmem>>, vector<2x256xf32>
    %c35 = arith.constant 35 : index
    %482 = memref.load %arg6[%c35] : memref<98xf32, #tpu.memory_space<smem>>
    %483 = vector.extract_strided_slice %481 {offsets = [0, 0], sizes = [1, 256], strides = [1, 1]} : vector<2x256xf32> to vector<1x256xf32>
    %484 = vector.broadcast %482 : f32 to vector<1x256xf32>
    %485 = arith.mulf %484, %483 : vector<1x256xf32>
    %c84 = arith.constant 84 : index
    %486 = memref.load %arg6[%c84] : memref<98xf32, #tpu.memory_space<smem>>
    %487 = vector.extract_strided_slice %481 {offsets = [1, 0], sizes = [1, 256], strides = [1, 1]} : vector<2x256xf32> to vector<1x256xf32>
    %488 = vector.broadcast %486 : f32 to vector<1x256xf32>
    %489 = arith.mulf %488, %487 : vector<1x256xf32>
    %490 = arith.addf %485, %489 : vector<1x256xf32>
    %491 = arith.mulf %490, %55 : vector<1x256xf32>
    %492 = arith.addf %480, %491 : vector<1x256xf32>
    %c0_97 = arith.constant 0 : index
    %c158 = arith.constant 158 : index
    %493 = vector.load %arg8[%c0_97, %c158] : memref<2x512xf32, #tpu.memory_space<vmem>>, vector<2x256xf32>
    %c36 = arith.constant 36 : index
    %494 = memref.load %arg6[%c36] : memref<98xf32, #tpu.memory_space<smem>>
    %495 = vector.extract_strided_slice %493 {offsets = [0, 0], sizes = [1, 256], strides = [1, 1]} : vector<2x256xf32> to vector<1x256xf32>
    %496 = vector.broadcast %494 : f32 to vector<1x256xf32>
    %497 = arith.mulf %496, %495 : vector<1x256xf32>
    %c85 = arith.constant 85 : index
    %498 = memref.load %arg6[%c85] : memref<98xf32, #tpu.memory_space<smem>>
    %499 = vector.extract_strided_slice %493 {offsets = [1, 0], sizes = [1, 256], strides = [1, 1]} : vector<2x256xf32> to vector<1x256xf32>
    %500 = vector.broadcast %498 : f32 to vector<1x256xf32>
    %501 = arith.mulf %500, %499 : vector<1x256xf32>
    %502 = arith.addf %497, %501 : vector<1x256xf32>
    %503 = arith.mulf %502, %56 : vector<1x256xf32>
    %504 = arith.addf %492, %503 : vector<1x256xf32>
    %c0_98 = arith.constant 0 : index
    %c159 = arith.constant 159 : index
    %505 = vector.load %arg8[%c0_98, %c159] : memref<2x512xf32, #tpu.memory_space<vmem>>, vector<2x256xf32>
    %c37 = arith.constant 37 : index
    %506 = memref.load %arg6[%c37] : memref<98xf32, #tpu.memory_space<smem>>
    %507 = vector.extract_strided_slice %505 {offsets = [0, 0], sizes = [1, 256], strides = [1, 1]} : vector<2x256xf32> to vector<1x256xf32>
    %508 = vector.broadcast %506 : f32 to vector<1x256xf32>
    %509 = arith.mulf %508, %507 : vector<1x256xf32>
    %c86 = arith.constant 86 : index
    %510 = memref.load %arg6[%c86] : memref<98xf32, #tpu.memory_space<smem>>
    %511 = vector.extract_strided_slice %505 {offsets = [1, 0], sizes = [1, 256], strides = [1, 1]} : vector<2x256xf32> to vector<1x256xf32>
    %512 = vector.broadcast %510 : f32 to vector<1x256xf32>
    %513 = arith.mulf %512, %511 : vector<1x256xf32>
    %514 = arith.addf %509, %513 : vector<1x256xf32>
    %515 = arith.mulf %514, %57 : vector<1x256xf32>
    %516 = arith.addf %504, %515 : vector<1x256xf32>
    %c0_99 = arith.constant 0 : index
    %c160 = arith.constant 160 : index
    %517 = vector.load %arg8[%c0_99, %c160] : memref<2x512xf32, #tpu.memory_space<vmem>>, vector<2x256xf32>
    %c38 = arith.constant 38 : index
    %518 = memref.load %arg6[%c38] : memref<98xf32, #tpu.memory_space<smem>>
    %519 = vector.extract_strided_slice %517 {offsets = [0, 0], sizes = [1, 256], strides = [1, 1]} : vector<2x256xf32> to vector<1x256xf32>
    %520 = vector.broadcast %518 : f32 to vector<1x256xf32>
    %521 = arith.mulf %520, %519 : vector<1x256xf32>
    %c87 = arith.constant 87 : index
    %522 = memref.load %arg6[%c87] : memref<98xf32, #tpu.memory_space<smem>>
    %523 = vector.extract_strided_slice %517 {offsets = [1, 0], sizes = [1, 256], strides = [1, 1]} : vector<2x256xf32> to vector<1x256xf32>
    %524 = vector.broadcast %522 : f32 to vector<1x256xf32>
    %525 = arith.mulf %524, %523 : vector<1x256xf32>
    %526 = arith.addf %521, %525 : vector<1x256xf32>
    %527 = arith.mulf %526, %58 : vector<1x256xf32>
    %528 = arith.addf %516, %527 : vector<1x256xf32>
    %c0_100 = arith.constant 0 : index
    %c161 = arith.constant 161 : index
    %529 = vector.load %arg8[%c0_100, %c161] : memref<2x512xf32, #tpu.memory_space<vmem>>, vector<2x256xf32>
    %c39 = arith.constant 39 : index
    %530 = memref.load %arg6[%c39] : memref<98xf32, #tpu.memory_space<smem>>
    %531 = vector.extract_strided_slice %529 {offsets = [0, 0], sizes = [1, 256], strides = [1, 1]} : vector<2x256xf32> to vector<1x256xf32>
    %532 = vector.broadcast %530 : f32 to vector<1x256xf32>
    %533 = arith.mulf %532, %531 : vector<1x256xf32>
    %c88 = arith.constant 88 : index
    %534 = memref.load %arg6[%c88] : memref<98xf32, #tpu.memory_space<smem>>
    %535 = vector.extract_strided_slice %529 {offsets = [1, 0], sizes = [1, 256], strides = [1, 1]} : vector<2x256xf32> to vector<1x256xf32>
    %536 = vector.broadcast %534 : f32 to vector<1x256xf32>
    %537 = arith.mulf %536, %535 : vector<1x256xf32>
    %538 = arith.addf %533, %537 : vector<1x256xf32>
    %539 = arith.mulf %538, %59 : vector<1x256xf32>
    %540 = arith.addf %528, %539 : vector<1x256xf32>
    %c0_101 = arith.constant 0 : index
    %c162 = arith.constant 162 : index
    %541 = vector.load %arg8[%c0_101, %c162] : memref<2x512xf32, #tpu.memory_space<vmem>>, vector<2x256xf32>
    %c40 = arith.constant 40 : index
    %542 = memref.load %arg6[%c40] : memref<98xf32, #tpu.memory_space<smem>>
    %543 = vector.extract_strided_slice %541 {offsets = [0, 0], sizes = [1, 256], strides = [1, 1]} : vector<2x256xf32> to vector<1x256xf32>
    %544 = vector.broadcast %542 : f32 to vector<1x256xf32>
    %545 = arith.mulf %544, %543 : vector<1x256xf32>
    %c89 = arith.constant 89 : index
    %546 = memref.load %arg6[%c89] : memref<98xf32, #tpu.memory_space<smem>>
    %547 = vector.extract_strided_slice %541 {offsets = [1, 0], sizes = [1, 256], strides = [1, 1]} : vector<2x256xf32> to vector<1x256xf32>
    %548 = vector.broadcast %546 : f32 to vector<1x256xf32>
    %549 = arith.mulf %548, %547 : vector<1x256xf32>
    %550 = arith.addf %545, %549 : vector<1x256xf32>
    %551 = arith.mulf %550, %60 : vector<1x256xf32>
    %552 = arith.addf %540, %551 : vector<1x256xf32>
    %c0_102 = arith.constant 0 : index
    %c163 = arith.constant 163 : index
    %553 = vector.load %arg8[%c0_102, %c163] : memref<2x512xf32, #tpu.memory_space<vmem>>, vector<2x256xf32>
    %c41 = arith.constant 41 : index
    %554 = memref.load %arg6[%c41] : memref<98xf32, #tpu.memory_space<smem>>
    %555 = vector.extract_strided_slice %553 {offsets = [0, 0], sizes = [1, 256], strides = [1, 1]} : vector<2x256xf32> to vector<1x256xf32>
    %556 = vector.broadcast %554 : f32 to vector<1x256xf32>
    %557 = arith.mulf %556, %555 : vector<1x256xf32>
    %c90 = arith.constant 90 : index
    %558 = memref.load %arg6[%c90] : memref<98xf32, #tpu.memory_space<smem>>
    %559 = vector.extract_strided_slice %553 {offsets = [1, 0], sizes = [1, 256], strides = [1, 1]} : vector<2x256xf32> to vector<1x256xf32>
    %560 = vector.broadcast %558 : f32 to vector<1x256xf32>
    %561 = arith.mulf %560, %559 : vector<1x256xf32>
    %562 = arith.addf %557, %561 : vector<1x256xf32>
    %563 = arith.mulf %562, %61 : vector<1x256xf32>
    %564 = arith.addf %552, %563 : vector<1x256xf32>
    %c0_103 = arith.constant 0 : index
    %c173 = arith.constant 173 : index
    %565 = vector.load %arg8[%c0_103, %c173] : memref<2x512xf32, #tpu.memory_space<vmem>>, vector<2x256xf32>
    %c42 = arith.constant 42 : index
    %566 = memref.load %arg6[%c42] : memref<98xf32, #tpu.memory_space<smem>>
    %567 = vector.extract_strided_slice %565 {offsets = [0, 0], sizes = [1, 256], strides = [1, 1]} : vector<2x256xf32> to vector<1x256xf32>
    %568 = vector.broadcast %566 : f32 to vector<1x256xf32>
    %569 = arith.mulf %568, %567 : vector<1x256xf32>
    %c91 = arith.constant 91 : index
    %570 = memref.load %arg6[%c91] : memref<98xf32, #tpu.memory_space<smem>>
    %571 = vector.extract_strided_slice %565 {offsets = [1, 0], sizes = [1, 256], strides = [1, 1]} : vector<2x256xf32> to vector<1x256xf32>
    %572 = vector.broadcast %570 : f32 to vector<1x256xf32>
    %573 = arith.mulf %572, %571 : vector<1x256xf32>
    %574 = arith.addf %569, %573 : vector<1x256xf32>
    %575 = arith.mulf %574, %55 : vector<1x256xf32>
    %576 = arith.addf %564, %575 : vector<1x256xf32>
    %c0_104 = arith.constant 0 : index
    %c174 = arith.constant 174 : index
    %577 = vector.load %arg8[%c0_104, %c174] : memref<2x512xf32, #tpu.memory_space<vmem>>, vector<2x256xf32>
    %c43 = arith.constant 43 : index
    %578 = memref.load %arg6[%c43] : memref<98xf32, #tpu.memory_space<smem>>
    %579 = vector.extract_strided_slice %577 {offsets = [0, 0], sizes = [1, 256], strides = [1, 1]} : vector<2x256xf32> to vector<1x256xf32>
    %580 = vector.broadcast %578 : f32 to vector<1x256xf32>
    %581 = arith.mulf %580, %579 : vector<1x256xf32>
    %c92 = arith.constant 92 : index
    %582 = memref.load %arg6[%c92] : memref<98xf32, #tpu.memory_space<smem>>
    %583 = vector.extract_strided_slice %577 {offsets = [1, 0], sizes = [1, 256], strides = [1, 1]} : vector<2x256xf32> to vector<1x256xf32>
    %584 = vector.broadcast %582 : f32 to vector<1x256xf32>
    %585 = arith.mulf %584, %583 : vector<1x256xf32>
    %586 = arith.addf %581, %585 : vector<1x256xf32>
    %587 = arith.mulf %586, %56 : vector<1x256xf32>
    %588 = arith.addf %576, %587 : vector<1x256xf32>
    %c0_105 = arith.constant 0 : index
    %c175 = arith.constant 175 : index
    %589 = vector.load %arg8[%c0_105, %c175] : memref<2x512xf32, #tpu.memory_space<vmem>>, vector<2x256xf32>
    %c44 = arith.constant 44 : index
    %590 = memref.load %arg6[%c44] : memref<98xf32, #tpu.memory_space<smem>>
    %591 = vector.extract_strided_slice %589 {offsets = [0, 0], sizes = [1, 256], strides = [1, 1]} : vector<2x256xf32> to vector<1x256xf32>
    %592 = vector.broadcast %590 : f32 to vector<1x256xf32>
    %593 = arith.mulf %592, %591 : vector<1x256xf32>
    %c93_106 = arith.constant 93 : index
    %594 = memref.load %arg6[%c93_106] : memref<98xf32, #tpu.memory_space<smem>>
    %595 = vector.extract_strided_slice %589 {offsets = [1, 0], sizes = [1, 256], strides = [1, 1]} : vector<2x256xf32> to vector<1x256xf32>
    %596 = vector.broadcast %594 : f32 to vector<1x256xf32>
    %597 = arith.mulf %596, %595 : vector<1x256xf32>
    %598 = arith.addf %593, %597 : vector<1x256xf32>
    %599 = arith.mulf %598, %57 : vector<1x256xf32>
    %600 = arith.addf %588, %599 : vector<1x256xf32>
    %c0_107 = arith.constant 0 : index
    %c176 = arith.constant 176 : index
    %601 = vector.load %arg8[%c0_107, %c176] : memref<2x512xf32, #tpu.memory_space<vmem>>, vector<2x256xf32>
    %c45 = arith.constant 45 : index
    %602 = memref.load %arg6[%c45] : memref<98xf32, #tpu.memory_space<smem>>
    %603 = vector.extract_strided_slice %601 {offsets = [0, 0], sizes = [1, 256], strides = [1, 1]} : vector<2x256xf32> to vector<1x256xf32>
    %604 = vector.broadcast %602 : f32 to vector<1x256xf32>
    %605 = arith.mulf %604, %603 : vector<1x256xf32>
    %c94_108 = arith.constant 94 : index
    %606 = memref.load %arg6[%c94_108] : memref<98xf32, #tpu.memory_space<smem>>
    %607 = vector.extract_strided_slice %601 {offsets = [1, 0], sizes = [1, 256], strides = [1, 1]} : vector<2x256xf32> to vector<1x256xf32>
    %608 = vector.broadcast %606 : f32 to vector<1x256xf32>
    %609 = arith.mulf %608, %607 : vector<1x256xf32>
    %610 = arith.addf %605, %609 : vector<1x256xf32>
    %611 = arith.mulf %610, %58 : vector<1x256xf32>
    %612 = arith.addf %600, %611 : vector<1x256xf32>
    %c0_109 = arith.constant 0 : index
    %c177 = arith.constant 177 : index
    %613 = vector.load %arg8[%c0_109, %c177] : memref<2x512xf32, #tpu.memory_space<vmem>>, vector<2x256xf32>
    %c46 = arith.constant 46 : index
    %614 = memref.load %arg6[%c46] : memref<98xf32, #tpu.memory_space<smem>>
    %615 = vector.extract_strided_slice %613 {offsets = [0, 0], sizes = [1, 256], strides = [1, 1]} : vector<2x256xf32> to vector<1x256xf32>
    %616 = vector.broadcast %614 : f32 to vector<1x256xf32>
    %617 = arith.mulf %616, %615 : vector<1x256xf32>
    %c95_110 = arith.constant 95 : index
    %618 = memref.load %arg6[%c95_110] : memref<98xf32, #tpu.memory_space<smem>>
    %619 = vector.extract_strided_slice %613 {offsets = [1, 0], sizes = [1, 256], strides = [1, 1]} : vector<2x256xf32> to vector<1x256xf32>
    %620 = vector.broadcast %618 : f32 to vector<1x256xf32>
    %621 = arith.mulf %620, %619 : vector<1x256xf32>
    %622 = arith.addf %617, %621 : vector<1x256xf32>
    %623 = arith.mulf %622, %59 : vector<1x256xf32>
    %624 = arith.addf %612, %623 : vector<1x256xf32>
    %c0_111 = arith.constant 0 : index
    %c178 = arith.constant 178 : index
    %625 = vector.load %arg8[%c0_111, %c178] : memref<2x512xf32, #tpu.memory_space<vmem>>, vector<2x256xf32>
    %c47 = arith.constant 47 : index
    %626 = memref.load %arg6[%c47] : memref<98xf32, #tpu.memory_space<smem>>
    %627 = vector.extract_strided_slice %625 {offsets = [0, 0], sizes = [1, 256], strides = [1, 1]} : vector<2x256xf32> to vector<1x256xf32>
    %628 = vector.broadcast %626 : f32 to vector<1x256xf32>
    %629 = arith.mulf %628, %627 : vector<1x256xf32>
    %c96_112 = arith.constant 96 : index
    %630 = memref.load %arg6[%c96_112] : memref<98xf32, #tpu.memory_space<smem>>
    %631 = vector.extract_strided_slice %625 {offsets = [1, 0], sizes = [1, 256], strides = [1, 1]} : vector<2x256xf32> to vector<1x256xf32>
    %632 = vector.broadcast %630 : f32 to vector<1x256xf32>
    %633 = arith.mulf %632, %631 : vector<1x256xf32>
    %634 = arith.addf %629, %633 : vector<1x256xf32>
    %635 = arith.mulf %634, %60 : vector<1x256xf32>
    %636 = arith.addf %624, %635 : vector<1x256xf32>
    %c0_113 = arith.constant 0 : index
    %c179 = arith.constant 179 : index
    %637 = vector.load %arg8[%c0_113, %c179] : memref<2x512xf32, #tpu.memory_space<vmem>>, vector<2x256xf32>
    %c48 = arith.constant 48 : index
    %638 = memref.load %arg6[%c48] : memref<98xf32, #tpu.memory_space<smem>>
    %639 = vector.extract_strided_slice %637 {offsets = [0, 0], sizes = [1, 256], strides = [1, 1]} : vector<2x256xf32> to vector<1x256xf32>
    %640 = vector.broadcast %638 : f32 to vector<1x256xf32>
    %641 = arith.mulf %640, %639 : vector<1x256xf32>
    %c97_114 = arith.constant 97 : index
    %642 = memref.load %arg6[%c97_114] : memref<98xf32, #tpu.memory_space<smem>>
    %643 = vector.extract_strided_slice %637 {offsets = [1, 0], sizes = [1, 256], strides = [1, 1]} : vector<2x256xf32> to vector<1x256xf32>
    %644 = vector.broadcast %642 : f32 to vector<1x256xf32>
    %645 = arith.mulf %644, %643 : vector<1x256xf32>
    %646 = arith.addf %641, %645 : vector<1x256xf32>
    %647 = arith.mulf %646, %61 : vector<1x256xf32>
    %648 = arith.addf %636, %647 : vector<1x256xf32>
    %649 = arith.negf %648 : vector<1x256xf32>
    %650 = math.exp %649 : vector<1x256xf32>
    %cst_115 = arith.constant 1.000000e+00 : f32
    %651 = vector.broadcast %cst_115 : f32 to vector<1x256xf32>
    %652 = arith.addf %651, %650 : vector<1x256xf32>
    %653 = arith.divf %651, %652 : vector<1x256xf32>
    %c0_116 = arith.constant 0 : index
    %c0_117 = arith.constant 0 : index
    %c0_118 = arith.constant 0 : index
    %654 = vector.load %arg7[%c0_116, %c0_117, %c0_118] : memref<1x32x256xf32, #tpu.memory_space<vmem>>, vector<1x32x256xf32>
    %655 = vector.shape_cast %654 : vector<1x32x256xf32> to vector<32x256xf32>
    %656 = vector.broadcast %653 : vector<1x256xf32> to vector<32x256xf32>
    %657 = arith.mulf %655, %656 : vector<32x256xf32>
    %c0_119 = arith.constant 0 : index
    %c0_120 = arith.constant 0 : index
    %c0_121 = arith.constant 0 : index
    %658 = vector.load %arg7[%c0_119, %c0_120, %c0_121] : memref<1x32x256xf32, #tpu.memory_space<vmem>>, vector<1x32x256xf32>
    %659 = vector.shape_cast %658 : vector<1x32x256xf32> to vector<32x256xf32>
    %660 = vector.shape_cast %657 : vector<32x256xf32> to vector<1x32x256xf32>
    tpu.vector_store %arg7[%c0_119, %c0_120, %c0_121], %660 {strides = array<i32>} : memref<1x32x256xf32, #tpu.memory_space<vmem>>, vector<1x32x256xf32>,
    return
  }
  func.func @transform_0(%arg0: i32) -> (i32, i32, i32) {
    %c0_i32 = arith.constant 0 : i32
    %c0_i32_0 = arith.constant 0 : i32
    %c0_i32_1 = arith.constant 0 : i32
    return %arg0, %c0_i32, %c0_i32_0 : i32, i32, i32
  }
  func.func @transform_1(%arg0: i32) -> (i32, i32) {
    %c0_i32 = arith.constant 0 : i32
    %c0_i32_0 = arith.constant 0 : i32
    %c0_i32_1 = arith.constant 0 : i32
    return %c0_i32, %c0_i32_0 : i32, i32
  }
  func.func @transform_2(%arg0: i32) -> (i32, i32) {
    %c0_i32 = arith.constant 0 : i32
    %c0_i32_0 = arith.constant 0 : i32
    %c0_i32_1 = arith.constant 0 : i32
    return %c0_i32, %c0_i32_0 : i32, i32
  }
  func.func @transform_3(%arg0: i32) -> (i32, i32) {
    %c0_i32 = arith.constant 0 : i32
    %c0_i32_0 = arith.constant 0 : i32
    %c0_i32_1 = arith.constant 0 : i32
    return %c0_i32, %c0_i32_0 : i32, i32
  }
  func.func @transform_4(%arg0: i32) -> (i32, i32) {
    %c0_i32 = arith.constant 0 : i32
    %c0_i32_0 = arith.constant 0 : i32
    %c0_i32_1 = arith.constant 0 : i32
    return %c0_i32, %c0_i32_0 : i32, i32
  }
  func.func @transform_5(%arg0: i32) -> i32 {
    %c0_i32 = arith.constant 0 : i32
    %c0_i32_0 = arith.constant 0 : i32
    return %c0_i32 : i32
  }
  func.func @transform_6(%arg0: i32) -> (i32, i32, i32) {
    %c0_i32 = arith.constant 0 : i32
    %c0_i32_0 = arith.constant 0 : i32
    %c0_i32_1 = arith.constant 0 : i32
    return %arg0, %c0_i32, %c0_i32_0 : i32, i32, i32
  }
}

</mosaic_0001>

<llo_original>
// kernel: tpu_custom_call.1
$region0: #{tpu_custom_call.1}
  #allocation0 [shape = 'u32[]', space=smem, size = 0x4, offset = 0x4, fixed_abs, tag = 'smem constant byte address 0x4 - core index']
  #allocation1 [shape = 'u32[144,128]{1,0:T(1,128)}', space=vmem, size = 0x12000, scoped, tag = 'internal scratch']
  #allocation2 [shape = 'f32[2,512]{1,0:T(2,128)}', space=vmem, size = 0x1000, scoped, tag = 'scratch operand']
  %s0 = inlined_call_operand.hbm [shape: f32[2,32,256], index: 0, kind: input, shape index: {}]
  %s1 = inlined_call_operand.vmem [shape: f32[32,2], index: 1, kind: input, shape index: {}]
  %s2 = inlined_call_operand.vmem [shape: f32[32,2], index: 2, kind: input, shape index: {}]
  %s3 = inlined_call_operand.vmem [shape: f32[32,2], index: 3, kind: input, shape index: {}]
  %s4 = inlined_call_operand.vmem [shape: f32[7,256], index: 4, kind: input, shape index: {}]
  %s5 = inlined_call_operand.vmem [shape: f32[98], index: 5, kind: input, shape index: {}]
  %s6 = inlined_call_operand.hbm [shape: f32[2,32,256], index: 6, kind: output, shape index: {}]
  %s7 = sld [smem:[#allocation0]]
  $region65: #{tpu_custom_call.1} parent=0
    _
  %s9 = ssub.s32 1, %s7
  %s10 = scalar_select 0, %s9, %s7
  $region1: #{tpu_custom_call.1} parent=0
    #allocation3 [shape = 'u8[65536]{0}', space=vmem, size = 0x10000, scoped, tag = 'input window, operand 0']
    #allocation4 [shape = 's32[2]{0}', space=sflag, size = 0x8, scoped, tag = 'scoped memory for tpu_custom_call.1']
    #allocation5 [shape = 's32[2]{0}', space=sflag, size = 0x8, scoped, tag = 'scoped memory for tpu_custom_call.1']
    #allocation6 [shape = 's32[2]{0}', space=sflag, size = 0x8, scoped, tag = 'scoped memory for tpu_custom_call.1']
    #allocation7 [shape = 'u8[512]{0}', space=smem, size = 0x200, scoped, tag = 'input window, operand 5, single buffered']
    #allocation8 [shape = 'u8[65536]{0}', space=vmem, size = 0x10000, scoped, tag = 'output window, operand 0']
    %11 = vsyncpa [#allocation4], 0
    %s12 = scalar_lea.sflag [#allocation4], 1
    %13 = vsyncpa %s12, 0
    %14 = vsyncpa [#allocation6], 0
    %15 = vsyncpa [#allocation5], 0
    %s16 = scalar_lea.sflag [#allocation5], 1
    %17 = vsyncpa %s16, 0
    loop: start=0, step=1, limit=4
    $region2: #{tpu_custom_call.1} parent=1 // loop_pre_header
      _
    $region3: #{tpu_custom_call.1} parent=1 // loop_header
      %s19 = sphi 0, %s23
      %p20 = scmp.ge.s32.totalorder %s19, 4
      %s29 = sphi 0, %s31
      %s32 = sphi 0, %s29
      %s33 = sphi 0, %s32
      %s49 = sphi 0, %s33
      %s53 = sphi 0, %s53
      %s55 = sphi 0, %s53
      %s56 = sphi 0, %s55
      %s70 = sphi 0, %s56
      %s74 = sphi 0, %s74
      %s76 = sphi 0, %s74
      %s77 = sphi 0, %s76
      %s91 = sphi 0, %s77
      %s95 = sphi 0, %s95
      %s97 = sphi 0, %s95
      %s98 = sphi 0, %s97
      %s112 = sphi 0, %s98
      %s116 = sphi 0, %s116
      %s118 = sphi 0, %s116
      %s119 = sphi 0, %s118
      %s133 = sphi 0, %s119
      %s137 = sphi 0, %s137
      %s139 = sphi 0, %s137
      %s140 = sphi 0, %s139
      %s154 = sphi 0, %s140
      %s160 = sphi 0, %s162
      %s163 = sphi 0, %s160
      %s164 = sphi 0, %s163
      %s180 = sphi 0, %s164
    $region4: #{tpu_custom_call.1} parent=1 // loop_header_branch
      %22 = sbr.rel (%p20) target = $region8
    $region5: #{tpu_custom_call.1} parent=1 // loop_body
      %s24 = ssub.s32 %s19, 1
      %s25 = ssub.s32 %s19, 2
      %s26 = sadd.s32 %s19, 1
      %s27 = ssub.s32 %s19, %s26
      %p28 = scmp.eq.s32.totalorder %s27, 0
      %s30 = sadd.s32 %s29, 1
      %s31 = scalar_select %p28, %s29, %s30
      %p34 = pneg %p28
      %p35 = scmp.eq.s32.totalorder %s19, 1
      %p36 = por %p34, %p35
      %p37 = scmp.ne.s32.totalorder %s29, %s32
      %p38 = scmp.eq.s32.totalorder %s19, 0
      %p39 = por %p37, %p38
      %p40 = scmp.ne.s32.totalorder %s29, %s32
      %p41 = scmp.eq.s32.totalorder %s24, 1
      %p42 = por %p40, %p41
      %p43 = scmp.ne.s32.totalorder %s32, %s33
      %p44 = scmp.eq.s32.totalorder %s24, 0
      %p45 = por %p43, %p44
      %p46 = scmp.ne.s32.totalorder %s32, %s33
      %p47 = scmp.eq.s32.totalorder %s25, 1
      %p48 = por %p46, %p47
      %p50 = scmp.ne.s32.totalorder %s33, %s49
      %p51 = scmp.eq.s32.totalorder %s25, 0
      %p52 = por %p50, %p51
      %s54 = sadd.s32 %s53, 1
      %p57 = scmp.eq.s32.totalorder %s19, 1
      %p58 = scmp.ne.s32.totalorder %s53, %s55
      %p59 = scmp.eq.s32.totalorder %s19, 0
      %p60 = por %p58, %p59
      %p61 = scmp.ne.s32.totalorder %s53, %s55
      %p62 = scmp.eq.s32.totalorder %s24, 1
      %p63 = por %p61, %p62
      %p64 = scmp.ne.s32.totalorder %s55, %s56
      %p65 = scmp.eq.s32.totalorder %s24, 0
      %p66 = por %p64, %p65
      %p67 = scmp.ne.s32.totalorder %s55, %s56
      %p68 = scmp.eq.s32.totalorder %s25, 1
      %p69 = por %p67, %p68
      %p71 = scmp.ne.s32.totalorder %s56, %s70
      %p72 = scmp.eq.s32.totalorder %s25, 0
      %p73 = por %p71, %p72
      %s75 = sadd.s32 %s74, 1
      %p78 = scmp.eq.s32.totalorder %s19, 1
      %p79 = scmp.ne.s32.totalorder %s74, %s76
      %p80 = scmp.eq.s32.totalorder %s19, 0
      %p81 = por %p79, %p80
      %p82 = scmp.ne.s32.totalorder %s74, %s76
      %p83 = scmp.eq.s32.totalorder %s24, 1
      %p84 = por %p82, %p83
      %p85 = scmp.ne.s32.totalorder %s76, %s77
      %p86 = scmp.eq.s32.totalorder %s24, 0
      %p87 = por %p85, %p86
      %p88 = scmp.ne.s32.totalorder %s76, %s77
      %p89 = scmp.eq.s32.totalorder %s25, 1
      %p90 = por %p88, %p89
      %p92 = scmp.ne.s32.totalorder %s77, %s91
      %p93 = scmp.eq.s32.totalorder %s25, 0
      %p94 = por %p92, %p93
      %s96 = sadd.s32 %s95, 1
      %p99 = scmp.eq.s32.totalorder %s19, 1
      %p100 = scmp.ne.s32.totalorder %s95, %s97
      %p101 = scmp.eq.s32.totalorder %s19, 0
      %p102 = por %p100, %p101
      %p103 = scmp.ne.s32.totalorder %s95, %s97
      %p104 = scmp.eq.s32.totalorder %s24, 1
      %p105 = por %p103, %p104
      %p106 = scmp.ne.s32.totalorder %s97, %s98
      %p107 = scmp.eq.s32.totalorder %s24, 0
      %p108 = por %p106, %p107
      %p109 = scmp.ne.s32.totalorder %s97, %s98
      %p110 = scmp.eq.s32.totalorder %s25, 1
      %p111 = por %p109, %p110
      %p113 = scmp.ne.s32.totalorder %s98, %s112
      %p114 = scmp.eq.s32.totalorder %s25, 0
      %p115 = por %p113, %p114
      %s117 = sadd.s32 %s116, 1
      %p120 = scmp.eq.s32.totalorder %s19, 1
      %p121 = scmp.ne.s32.totalorder %s116, %s118
      %p122 = scmp.eq.s32.totalorder %s19, 0
      %p123 = por %p121, %p122
      %p124 = scmp.ne.s32.totalorder %s116, %s118
      %p125 = scmp.eq.s32.totalorder %s24, 1
      %p126 = por %p124, %p125
      %p127 = scmp.ne.s32.totalorder %s118, %s119
      %p128 = scmp.eq.s32.totalorder %s24, 0
      %p129 = por %p127, %p128
      %p130 = scmp.ne.s32.totalorder %s118, %s119
      %p131 = scmp.eq.s32.totalorder %s25, 1
      %p132 = por %p130, %p131
      %p134 = scmp.ne.s32.totalorder %s119, %s133
      %p135 = scmp.eq.s32.totalorder %s25, 0
      %p136 = por %p134, %p135
      %s138 = sadd.s32 %s137, 1
      %p141 = scmp.eq.s32.totalorder %s19, 1
      %p142 = scmp.ne.s32.totalorder %s137, %s139
      %p143 = scmp.eq.s32.totalorder %s19, 0
      %p144 = por %p142, %p143
      %p145 = scmp.ne.s32.totalorder %s137, %s139
      %p146 = scmp.eq.s32.totalorder %s24, 1
      %p147 = por %p145, %p146
      %p148 = scmp.ne.s32.totalorder %s139, %s140
      %p149 = scmp.eq.s32.totalorder %s24, 0
      %p150 = por %p148, %p149
      %p151 = scmp.ne.s32.totalorder %s139, %s140
      %p152 = scmp.eq.s32.totalorder %s25, 1
      %p153 = por %p151, %p152
      %p155 = scmp.ne.s32.totalorder %s140, %s154
      %p156 = scmp.eq.s32.totalorder %s25, 0
      %p157 = por %p155, %p156
      %s158 = ssub.s32 %s19, %s26
      %p159 = scmp.eq.s32.totalorder %s158, 0
      %s161 = sadd.s32 %s160, 1
      %s162 = scalar_select %p159, %s160, %s161
      %p165 = pneg %p159
      %p166 = scmp.eq.s32.totalorder %s19, 1
      %p167 = por %p165, %p166
      %p168 = scmp.ne.s32.totalorder %s160, %s163
      %p169 = scmp.eq.s32.totalorder %s19, 0
      %p170 = por %p168, %p169
      %p171 = scmp.ne.s32.totalorder %s160, %s163
      %p172 = scmp.eq.s32.totalorder %s24, 1
      %p173 = por %p171, %p172
      %p174 = scmp.ne.s32.totalorder %s163, %s164
      %p175 = scmp.eq.s32.totalorder %s24, 0
      %p176 = por %p174, %p175
      %p177 = scmp.ne.s32.totalorder %s163, %s164
      %p178 = scmp.eq.s32.totalorder %s25, 1
      %p179 = por %p177, %p178
      %p181 = scmp.ne.s32.totalorder %s164, %s180
      %p182 = scmp.eq.s32.totalorder %s25, 0
      %p183 = por %p181, %p182
      %p184 = scmp.le.s32.totalorder 1, %s19
      %p185 = scmp.lt.s32.totalorder %s19, 3
      %p186 = pnand %p184, %p185
      %p187 = pneg %p186
      // Predicated region
      $region9: #{tpu_custom_call.1} parent=5 // pred_check
        _
      $region10: #{tpu_custom_call.1} parent=5 // pred_check_branch
        %189 = sbr.rel (%p186) target = $region12
      $region11: #{tpu_custom_call.1} parent=5 // pred_region
        %s190 = ssub.s32 %s19, 1
        // Predicated region
        $region13: #{tpu_custom_call.1} parent=11 // pred_check
          %p191 = pneg %p66
        $region14: #{tpu_custom_call.1} parent=11 // pred_check_branch
          %193 = sbr.rel (%p191) target = $region16
        $region15: #{tpu_custom_call.1} parent=11 // pred_region
          _
        $region16: #{tpu_custom_call.1} parent=11 // pred_fallthru
          _
        // Predicated region
        $region17: #{tpu_custom_call.1} parent=11 // pred_check
          %p194 = pneg %p87
        $region18: #{tpu_custom_call.1} parent=11 // pred_check_branch
          %196 = sbr.rel (%p194) target = $region20
        $region19: #{tpu_custom_call.1} parent=11 // pred_region
          _
        $region20: #{tpu_custom_call.1} parent=11 // pred_fallthru
          _
        // Predicated region
        $region21: #{tpu_custom_call.1} parent=11 // pred_check
          %p197 = pneg %p108
        $region22: #{tpu_custom_call.1} parent=11 // pred_check_branch
          %199 = sbr.rel (%p197) target = $region24
        $region23: #{tpu_custom_call.1} parent=11 // pred_region
          _
        $region24: #{tpu_custom_call.1} parent=11 // pred_fallthru
          _
        // Predicated region
        $region25: #{tpu_custom_call.1} parent=11 // pred_check
          %p200 = pneg %p129
        $region26: #{tpu_custom_call.1} parent=11 // pred_check_branch
          %202 = sbr.rel (%p200) target = $region28
        $region27: #{tpu_custom_call.1} parent=11 // pred_region
          _
        $region28: #{tpu_custom_call.1} parent=11 // pred_fallthru
          _
        // Predicated region
        $region29: #{tpu_custom_call.1} parent=11 // pred_check
          %p203 = pneg %p150
        $region30: #{tpu_custom_call.1} parent=11 // pred_check_branch
          %205 = sbr.rel (%p203) target = $region32
        $region31: #{tpu_custom_call.1} parent=11 // pred_region
          %s207 = ssub.s32 16, 16
          %208 = vsyncadd [#allocation6], %s207
          %s210 = sshll.u32 %s5, 4
          %s211 = int_to_ptr.vmem [resolvable:$true] %s210
          %213 = dma.vmem_to_smem %s211, 16, [#allocation7], [#allocation6]
        $region32: #{tpu_custom_call.1} parent=11 // pred_fallthru
          _
      $region12: #{tpu_custom_call.1} parent=5 // pred_fallthru
        _
      %p214 = scmp.lt.s32.totalorder %s19, 2
      // Predicated region
      $region33: #{tpu_custom_call.1} parent=5 // pred_check
        %p215 = pneg %p214
      $region34: #{tpu_custom_call.1} parent=5 // pred_check_branch
        %217 = sbr.rel (%p215) target = $region36
      $region35: #{tpu_custom_call.1} parent=5 // pred_region
        // Predicated region
        $region37: #{tpu_custom_call.1} parent=35 // pred_check
          %p218 = pneg %p39
        $region38: #{tpu_custom_call.1} parent=35 // pred_check_branch
          %220 = sbr.rel (%p218) target = $region40
        $region39: #{tpu_custom_call.1} parent=35 // pred_region
          %s221 = sand.u32 %s29, 1
          %s222 = scalar_lea.sflag [#allocation4], %s221
          %s223 = sand.u32 %s29, 1
          %s224 = smul.addr %s223, 64
          %s225 = scalar_lea.vmem [#allocation3], %s224
          %s227 = ssub.s32 1024, 1024
          %228 = vsyncadd %s222, %s227
          %s229 = smul.addr %s19, 8
          %s230 = smul.addr %s229, 128
          %s231 = scalar_lea.hbm %s0, %s230
          %s232 = sshll.u32 %s225, 4
          %s233 = int_to_ptr.vmem [resolvable:$true] %s232
          %238 = dma.hbm_to_vmem [thread:$0]  %s231, 1024, %s233, %s222, 256, 256, 16
        $region40: #{tpu_custom_call.1} parent=35 // pred_fallthru
          _
      $region36: #{tpu_custom_call.1} parent=5 // pred_fallthru
        _
      %p239 = scmp.le.s32.totalorder 1, %s19
      %p240 = scmp.lt.s32.totalorder %s19, 3
      %p241 = pnand %p239, %p240
      %p242 = pneg %p241
      // Predicated region
      $region41: #{tpu_custom_call.1} parent=5 // pred_check
        _
      $region42: #{tpu_custom_call.1} parent=5 // pred_check_branch
        %244 = sbr.rel (%p241) target = $region44
      $region43: #{tpu_custom_call.1} parent=5 // pred_region
        %s245 = ssub.s32 %s19, 1
        %s246 = sand.u32 %s32, 1
        %s247 = scalar_lea.sflag [#allocation4], %s246
        %s248 = sand.u32 %s32, 1
        %s249 = smul.addr %s248, 64
        %s250 = scalar_lea.vmem [#allocation3], %s249
        // Predicated region
        $region45: #{tpu_custom_call.1} parent=43 // pred_check
          %p251 = pneg %p45
        $region46: #{tpu_custom_call.1} parent=43 // pred_check_branch
          %253 = sbr.rel (%p251) target = $region48
        $region47: #{tpu_custom_call.1} parent=43 // pred_region
          %254 = dma.done %s247, 1024
        $region48: #{tpu_custom_call.1} parent=43 // pred_fallthru
          _
        // Predicated region
        $region49: #{tpu_custom_call.1} parent=43 // pred_check
          %p255 = pneg %p150
        $region50: #{tpu_custom_call.1} parent=43 // pred_check_branch
          %257 = sbr.rel (%p255) target = $region52
        $region51: #{tpu_custom_call.1} parent=43 // pred_region
          %258 = dma.done [#allocation6], 16
        $region52: #{tpu_custom_call.1} parent=43 // pred_fallthru
          _
        %259 = sfence
        %s260 = sand.u32 %s32, 1
        %s261 = scalar_lea.sflag [#allocation4], %s260
        %s262 = sand.u32 %s32, 1
        %s263 = smul.addr %s262, 64
        %s264 = scalar_lea.vmem [#allocation3], %s263
        %p265 = pneg %p45
        %p266 = pneg %p42
        %p267 = pneg %p66
        %p268 = pneg %p63
        %p269 = pneg %p87
        %p270 = pneg %p84
        %p271 = pneg %p108
        %p272 = pneg %p105
        %p273 = pneg %p129
        %p274 = pneg %p126
        %p275 = pneg %p150
        %p276 = pneg %p147
        %p277 = pneg %p176
        %p278 = pneg %p173
        %s279 = sand.u32 %s163, 1
        %s280 = scalar_lea.sflag [#allocation5], %s279
        %s281 = sand.u32 %s163, 1
        %s282 = smul.addr %s281, 64
        %s283 = scalar_lea.vmem [#allocation8], %s282
        %v284 = vld [vmem:[%s250] sm:$0xff]
        %v285 = vld [vmem:[%s250 + $0x8] sm:$0xff]
        %v286 = vld [vmem:[%s250 + $0x10] sm:$0xff]
        %v287 = vld [vmem:[%s250 + $0x18] sm:$0xff]
        %v288 = vld [vmem:[%s250 + $0x20] sm:$0xff]
        %v289 = vld [vmem:[%s250 + $0x28] sm:$0xff]
        %v290 = vld [vmem:[%s250 + $0x30] sm:$0xff]
        %v291 = vld [vmem:[%s250 + $0x38] sm:$0xff]
        %v292 = vadd.f32 %v284, %v285
        %293 = vadd.xlane.f32.xlu0 %v292
        %v294 = vpop.xlane.xlu0 %293
        %v295 = vadd.f32 %v286, %v287
        %296 = vadd.xlane.f32.xlu0 %v295
        %v297 = vpop.xlane.xlu0 %296
        %v298 = vadd.f32 %v288, %v289
        %299 = vadd.xlane.f32.xlu0 %v298
        %v300 = vpop.xlane.xlu0 %299
        %v301 = vadd.f32 %v290, %v291
        %302 = vadd.xlane.f32.xlu0 %v301
        %v303 = vpop.xlane.xlu0 %302
        %v304 = vrcp.pop 256.0
        %v305 = vmul.f32 %v294, %v304
        %v306 = vmul.f32 %v297, %v304
        %v307 = vmul.f32 %v300, %v304
        %v308 = vmul.f32 %v303, %v304
        %v309 = vmax.f32 %v284, %v285
        %310 = vmax.xlane.f32.xlu0 %v309
        %v311 = vpop.xlane.xlu0 %310
        %v312 = vmax.f32 %v286, %v287
        %313 = vmax.xlane.f32.xlu0 %v312
        %v314 = vpop.xlane.xlu0 %313
        %v315 = vmax.f32 %v288, %v289
        %316 = vmax.xlane.f32.xlu0 %v315
        %v317 = vpop.xlane.xlu0 %316
        %v318 = vmax.f32 %v290, %v291
        %319 = vmax.xlane.f32.xlu0 %v318
        %v320 = vpop.xlane.xlu0 %319
        %v321 = vld [vmem:[%s1] sm:$0xff]
        %v322 = vld [vmem:[%s1 + $0x8] sm:$0xff]
        %v323 = vld [vmem:[%s1 + $0x10] sm:$0xff]
        %v324 = vld [vmem:[%s1 + $0x18] sm:$0xff]
        %v325 = vmul.f32 %v321, %v305
        %v326 = vmul.f32 %v322, %v306
        %v327 = vmul.f32 %v323, %v307
        %v328 = vmul.f32 %v324, %v308
        %v329 = vld [vmem:[%s2] sm:$0xff]
        %v330 = vld [vmem:[%s2 + $0x8] sm:$0xff]
        %v331 = vld [vmem:[%s2 + $0x10] sm:$0xff]
        %v332 = vld [vmem:[%s2 + $0x18] sm:$0xff]
        %v333 = vmul.f32 %v329, %v311
        %v334 = vmul.f32 %v330, %v314
        %v335 = vmul.f32 %v331, %v317
        %v336 = vmul.f32 %v332, %v320
        %v337 = vadd.f32 %v325, %v333
        %v338 = vadd.f32 %v326, %v334
        %v339 = vadd.f32 %v327, %v335
        %v340 = vadd.f32 %v328, %v336
        %vm341 = vcmask 15360
        %v342 = vsel %vm341, %v337, 0.0
        %v343 = vsel %vm341, %v338, 0.0
        %v344 = vadd.f32 %v342, %v343
        %v345 = vsel %vm341, %v339, 0.0
        %v346 = vadd.f32 %v344, %v345
        %v347 = vsel %vm341, %v340, 0.0
        %v348 = vadd.f32 %v346, %v347
        %v349 = vrot.slane %v348, 4
        %v350 = vadd.f32 %v348, %v349
        %v351 = vrot.slane %v350, 2
        %v352 = vadd.f32 %v350, %v351
        %v353 = vrot.slane %v352, 1
        %v354 = vadd.f32 %v352, %v353
        %v355 = vxor.u32 %v354, 2147483648
        %v356 = vmul.f32 %v355, 1.442695
        %v357 = vpow.pop %v356
        %v358 = vadd.f32 %v357, 1.0
        %v359 = vrcp.pop %v358
        %v360 = vmul.f32 1.0, %v359
        %v361 = vld [vmem:[%s3] sm:$0xff]
        %v362 = vld [vmem:[%s3 + $0x8] sm:$0xff]
        %v363 = vld [vmem:[%s3 + $0x10] sm:$0xff]
        %v364 = vld [vmem:[%s3 + $0x18] sm:$0xff]
        %v365 = vmul.f32 %v361, %v360
        %v366 = vmul.f32 %v362, %v360
        %v367 = vmul.f32 %v363, %v360
        %v368 = vmul.f32 %v364, %v360
        %v369 = vsel %vm341, %v365, 0.0
        %370 = vadd.xlane.f32.xlu0 %v369
        %v371 = vpop.xlane.xlu0 %370
        %v372 = vsel %vm341, %v366, 0.0
        %373 = vadd.xlane.f32.xlu0 %v372
        %v374 = vpop.xlane.xlu0 %373
        %v375 = vsel %vm341, %v367, 0.0
        %376 = vadd.xlane.f32.xlu0 %v375
        %v377 = vpop.xlane.xlu0 %376
        %v378 = vsel %vm341, %v368, 0.0
        %379 = vadd.xlane.f32.xlu0 %v378
        %v380 = vpop.xlane.xlu0 %379
        %v381 = vxor.u32 %v371, 2147483648
        %v382 = vxor.u32 %v374, 2147483648
        %v383 = vxor.u32 %v377, 2147483648
        %v384 = vxor.u32 %v380, 2147483648
        %v385 = vmul.f32 %v381, 1.442695
        %v386 = vpow.pop %v385
        %v387 = vmul.f32 %v382, 1.442695
        %v388 = vpow.pop %v387
        %v389 = vmul.f32 %v383, 1.442695
        %v390 = vpow.pop %v389
        %v391 = vmul.f32 %v384, 1.442695
        %v392 = vpow.pop %v391
        %v393 = vadd.f32 %v386, 1.0
        %v394 = vadd.f32 %v388, 1.0
        %v395 = vadd.f32 %v390, 1.0
        %v396 = vadd.f32 %v392, 1.0
        %v397 = vrcp.pop %v393
        %v398 = vmul.f32 1.0, %v397
        %v399 = vrcp.pop %v394
        %v400 = vmul.f32 1.0, %v399
        %v401 = vrcp.pop %v395
        %v402 = vmul.f32 1.0, %v401
        %v403 = vrcp.pop %v396
        %v404 = vmul.f32 1.0, %v403
        %v405 = vmul.f32 %v284, %v398
        %v406 = vmul.f32 %v285, %v398
        %v407 = vmul.f32 %v286, %v400
        %v408 = vmul.f32 %v287, %v400
        %v409 = vmul.f32 %v288, %v402
        %v410 = vmul.f32 %v289, %v402
        %v411 = vmul.f32 %v290, %v404
        %v412 = vmul.f32 %v291, %v404
        %413 = vst [vmem:[%s283] sm:$0xff] %v405
        %414 = vst [vmem:[%s283 + $0x8] sm:$0xff] %v406
        %415 = vst [vmem:[%s283 + $0x10] sm:$0xff] %v407
        %416 = vst [vmem:[%s283 + $0x18] sm:$0xff] %v408
        %417 = vst [vmem:[%s283 + $0x20] sm:$0xff] %v409
        %418 = vst [vmem:[%s283 + $0x28] sm:$0xff] %v410
        %419 = vst [vmem:[%s283 + $0x30] sm:$0xff] %v411
        %420 = vst [vmem:[%s283 + $0x38] sm:$0xff] %v412
        %v421 = vld [vmem:[%s283] sm:$0xff]
        %v422 = vld [vmem:[%s283 + $0x8] sm:$0xff]
        %v423 = vld [vmem:[%s283 + $0x10] sm:$0xff]
        %v424 = vld [vmem:[%s283 + $0x18] sm:$0xff]
        %v425 = vld [vmem:[%s283 + $0x20] sm:$0xff]
        %v426 = vld [vmem:[%s283 + $0x28] sm:$0xff]
        %v427 = vld [vmem:[%s283 + $0x30] sm:$0xff]
        %v428 = vld [vmem:[%s283 + $0x38] sm:$0xff]
        %v429 = vadd.f32 %v421, %v423
        %v430 = vadd.f32 %v429, %v425
        %v431 = vadd.f32 %v430, %v427
        %v432 = vrot.slane %v431, 4
        %v433 = vadd.f32 %v431, %v432
        %v434 = vrot.slane %v433, 2
        %v435 = vadd.f32 %v433, %v434
        %v436 = vrot.slane %v435, 1
        %v437 = vadd.f32 %v435, %v436
        %v438 = vadd.f32 %v422, %v424
        %v439 = vadd.f32 %v438, %v426
        %v440 = vadd.f32 %v439, %v428
        %v441 = vrot.slane %v440, 4
        %v442 = vadd.f32 %v440, %v441
        %v443 = vrot.slane %v442, 2
        %v444 = vadd.f32 %v442, %v443
        %v445 = vrot.slane %v444, 1
        %v446 = vadd.f32 %v444, %v445
        %v447 = vrcp.pop 32.0
        %v448 = vmul.f32 %v437, %v447
        %v449 = vmul.f32 %v446, %v447
        %v450 = vmax.f32 %v421, %v425
        %v451 = vmax.f32 %v423, %v427
        %v452 = vmax.f32 %v450, %v451
        %v453 = vrot.slane %v452, 4
        %v454 = vmax.f32 %v452, %v453
        %v455 = vrot.slane %v454, 2
        %v456 = vmax.f32 %v454, %v455
        %v457 = vrot.slane %v456, 1
        %v458 = vmax.f32 %v456, %v457
        %v459 = vmax.f32 %v422, %v426
        %v460 = vmax.f32 %v424, %v428
        %v461 = vmax.f32 %v459, %v460
        %v462 = vrot.slane %v461, 4
        %v463 = vmax.f32 %v461, %v462
        %v464 = vrot.slane %v463, 2
        %v465 = vmax.f32 %v463, %v464
        %v466 = vrot.slane %v465, 1
        %v467 = vmax.f32 %v465, %v466
        %468 = vst [vmem:[#allocation2] sm:$0xff] 0.0
        %v471 = vcombine.low %v448, %v449
        %v473 = vunpack.c.l.s4 1966171168
        %v474 = vunpack.c.0.s8 %v473
        %v475 = vlaneseq
        %v476 = vshrl.u32 %v475, 7
        %v477 = vsub.s32 %v474, %v476
        %v478 = vrot.slane %v471, %v477
        %v480 = vunpack.c.l.s4 1966171168
        %v481 = vunpack.c.0.s8 %v480
        %v482 = vlaneseq
        %v483 = vshrl.u32 %v482, 7
        %v484 = vsub.s32 %v481, %v483
        %v485 = vrot.slane %v478, %v484
        %v487 = vlaneseq
        %vm488 = vcmp.ge.s32.totalorder %v487, 0
        %vm489 = vcmp.lt.s32.totalorder %v487, 256
        %vm490 = vmand %vm488, %vm489
        %s491 = scalar_lea.vmem [#allocation2], 2
        %492 = vst.msk [vmem:[%s491] ss:$2 sm:$0x3] %vm490, %v485
        %v495 = vcombine.low %v458, %v467
        %v497 = vunpack.c.l.s4 1966171168
        %v498 = vunpack.c.0.s8 %v497
        %v499 = vlaneseq
        %v500 = vshrl.u32 %v499, 7
        %v501 = vsub.s32 %v498, %v500
        %v502 = vrot.slane %v495, %v501
        %v504 = vunpack.c.l.s4 1966171168
        %v505 = vunpack.c.0.s8 %v504
        %v506 = vlaneseq
        %v507 = vshrl.u32 %v506, 7
        %v508 = vsub.s32 %v505, %v507
        %v509 = vrot.slane %v502, %v508
        %s511 = scalar_lea.vmem [#allocation2], 3
        %512 = vst.msk [vmem:[%s511] ss:$2 sm:$0x3] %vm490, %v509
        %v513 = vld [vmem:[%s4] ss:$8 sm:$0x3]
        %s514 = scalar_lea.vmem %s4, 1
        %v515 = vld [vmem:[%s514] ss:$8 sm:$0x3]
        %s516 = scalar_lea.vmem %s4, 2
        %v517 = vld [vmem:[%s516] ss:$8 sm:$0x3]
        %s518 = scalar_lea.vmem %s4, 3
        %v519 = vld [vmem:[%s518] ss:$8 sm:$0x3]
        %s520 = scalar_lea.vmem %s4, 4
        %v521 = vld [vmem:[%s520] ss:$8 sm:$0x3]
        %s522 = scalar_lea.vmem %s4, 5
        %v523 = vld [vmem:[%s522] ss:$8 sm:$0x3]
        %s524 = scalar_lea.vmem %s4, 6
        %v525 = vld [vmem:[%s524] ss:$8 sm:$0x3]
        %v526 = vld [vmem:[#allocation2] sm:$0x3f]
        %s527 = sld [smem:[#allocation7]]
        %v528 = vstv %s527
        %v529 = vmul.f32 %v528, %v526
        %s530 = sld [smem:[#allocation7 + $0x31]]
        %v531 = vstv %s530
        %v532 = vmul.f32 %v531, %v526
        %v534 = vrot.slane %v532, 7
        %v535 = vrot.slane %v534, 2
        %v537 = vadd.f32 %v529, %v535
        %v540 = vunpack.c.l.s4 857870592
        %v541 = vunpack.c.0.s8 %v540
        %v542 = vlaneseq
        %v543 = vshrl.u32 %v542, 7
        %v544 = vsub.s32 %v541, %v543
        %v545 = vrot.slane %v513, %v544
        %546 = vrot.lane.b32.xlu0 %v545, 77
        %v547 = vpop.permute.xlu0 %546
        %v548 = vrot.slane %v547, 6
        %vm549 = vcmask 629760
        %v550 = vsel %vm549, %v548, %v547
        %v552 = vmul.f32 %v537, %v550
        %s553 = sld [smem:[#allocation7 + $0x1]]
        %v554 = vstv %s553
        %v555 = vmul.f32 %v554, %v526
        %s556 = sld [smem:[#allocation7 + $0x32]]
        %v557 = vstv %s556
        %v558 = vmul.f32 %v557, %v526
        %v560 = vrot.slane %v558, 7
        %v561 = vrot.slane %v560, 2
        %v563 = vadd.f32 %v555, %v561
        %v566 = vunpack.c.l.s4 857870592
        %v567 = vunpack.c.0.s8 %v566
        %v568 = vlaneseq
        %v569 = vshrl.u32 %v568, 7
        %v570 = vsub.s32 %v567, %v569
        %v571 = vrot.slane %v515, %v570
        %572 = vrot.lane.b32.xlu0 %v571, 78
        %v573 = vpop.permute.xlu0 %572
        %v574 = vrot.slane %v573, 6
        %vm575 = vcmask 637952
        %v576 = vsel %vm575, %v574, %v573
        %v578 = vmul.f32 %v563, %v576
        %580 = vrot.lane.b32.xlu0 %v578, 127
        %v581 = vpop.permute.xlu0 %580
        %v582 = vrot.slane %v581, 2
        %vm583 = vcmask 1039360
        %v584 = vsel %vm583, %v581, %v582
        %v586 = vadd.f32 %v552, %v584
        %s587 = sld [smem:[#allocation7 + $0x2]]
        %v588 = vstv %s587
        %v589 = vmul.f32 %v588, %v526
        %s590 = sld [smem:[#allocation7 + $0x33]]
        %v591 = vstv %s590
        %v592 = vmul.f32 %v591, %v526
        %v594 = vrot.slane %v592, 7
        %v595 = vrot.slane %v594, 2
        %v597 = vadd.f32 %v589, %v595
        %v600 = vunpack.c.l.s4 857870592
        %v601 = vunpack.c.0.s8 %v600
        %v602 = vlaneseq
        %v603 = vshrl.u32 %v602, 7
        %v604 = vsub.s32 %v601, %v603
        %v605 = vrot.slane %v517, %v604
        %606 = vrot.lane.b32.xlu0 %v605, 79
        %v607 = vpop.permute.xlu0 %606
        %v608 = vrot.slane %v607, 6
        %vm609 = vcmask 646144
        %v610 = vsel %vm609, %v608, %v607
        %v612 = vmul.f32 %v597, %v610
        %614 = vrot.lane.b32.xlu0 %v612, 126
        %v615 = vpop.permute.xlu0 %614
        %v616 = vrot.slane %v615, 2
        %vm617 = vcmask 1031168
        %v618 = vsel %vm617, %v615, %v616
        %v620 = vadd.f32 %v586, %v618
        %s621 = sld [smem:[#allocation7 + $0x3]]
        %v622 = vstv %s621
        %v623 = vmul.f32 %v622, %v526
        %s624 = sld [smem:[#allocation7 + $0x34]]
        %v625 = vstv %s624
        %v626 = vmul.f32 %v625, %v526
        %v628 = vrot.slane %v626, 7
        %v629 = vrot.slane %v628, 2
        %v631 = vadd.f32 %v623, %v629
        %v634 = vunpack.c.l.s4 857870592
        %v635 = vunpack.c.0.s8 %v634
        %v636 = vlaneseq
        %v637 = vshrl.u32 %v636, 7
        %v638 = vsub.s32 %v635, %v637
        %v639 = vrot.slane %v519, %v638
        %640 = vrot.lane.b32.xlu0 %v639, 80
        %v641 = vpop.permute.xlu0 %640
        %v642 = vrot.slane %v641, 6
        %vm643 = vcmask 654336
        %v644 = vsel %vm643, %v642, %v641
        %v646 = vmul.f32 %v631, %v644
        %648 = vrot.lane.b32.xlu0 %v646, 125
        %v649 = vpop.permute.xlu0 %648
        %v650 = vrot.slane %v649, 2
        %vm651 = vcmask 1022976
        %v652 = vsel %vm651, %v649, %v650
        %v654 = vadd.f32 %v620, %v652
        %s655 = sld [smem:[#allocation7 + $0x4]]
        %v656 = vstv %s655
        %v657 = vmul.f32 %v656, %v526
        %s658 = sld [smem:[#allocation7 + $0x35]]
        %v659 = vstv %s658
        %v660 = vmul.f32 %v659, %v526
        %v662 = vrot.slane %v660, 7
        %v663 = vrot.slane %v662, 2
        %v665 = vadd.f32 %v657, %v663
        %v668 = vunpack.c.l.s4 857870592
        %v669 = vunpack.c.0.s8 %v668
        %v670 = vlaneseq
        %v671 = vshrl.u32 %v670, 7
        %v672 = vsub.s32 %v669, %v671
        %v673 = vrot.slane %v521, %v672
        %674 = vrot.lane.b32.xlu0 %v673, 81
        %v675 = vpop.permute.xlu0 %674
        %v676 = vrot.slane %v675, 6
        %vm677 = vcmask 662528
        %v678 = vsel %vm677, %v676, %v675
        %v680 = vmul.f32 %v665, %v678
        %682 = vrot.lane.b32.xlu0 %v680, 124
        %v683 = vpop.permute.xlu0 %682
        %v684 = vrot.slane %v683, 2
        %vm685 = vcmask 1014784
        %v686 = vsel %vm685, %v683, %v684
        %v688 = vadd.f32 %v654, %v686
        %s689 = sld [smem:[#allocation7 + $0x5]]
        %v690 = vstv %s689
        %v691 = vmul.f32 %v690, %v526
        %s692 = sld [smem:[#allocation7 + $0x36]]
        %v693 = vstv %s692
        %v694 = vmul.f32 %v693, %v526
        %v696 = vrot.slane %v694, 7
        %v697 = vrot.slane %v696, 2
        %v699 = vadd.f32 %v691, %v697
        %v702 = vunpack.c.l.s4 857870592
        %v703 = vunpack.c.0.s8 %v702
        %v704 = vlaneseq
        %v705 = vshrl.u32 %v704, 7
        %v706 = vsub.s32 %v703, %v705
        %v707 = vrot.slane %v523, %v706
        %708 = vrot.lane.b32.xlu0 %v707, 82
        %v709 = vpop.permute.xlu0 %708
        %v710 = vrot.slane %v709, 6
        %vm711 = vcmask 670720
        %v712 = vsel %vm711, %v710, %v709
        %v714 = vmul.f32 %v699, %v712
        %716 = vrot.lane.b32.xlu0 %v714, 123
        %v717 = vpop.permute.xlu0 %716
        %v718 = vrot.slane %v717, 2
        %vm719 = vcmask 1006592
        %v720 = vsel %vm719, %v717, %v718
        %v722 = vadd.f32 %v688, %v720
        %s723 = sld [smem:[#allocation7 + $0x6]]
        %v724 = vstv %s723
        %v725 = vmul.f32 %v724, %v526
        %s726 = sld [smem:[#allocation7 + $0x37]]
        %v727 = vstv %s726
        %v728 = vmul.f32 %v727, %v526
        %v730 = vrot.slane %v728, 7
        %v731 = vrot.slane %v730, 2
        %v733 = vadd.f32 %v725, %v731
        %v736 = vunpack.c.l.s4 857870592
        %v737 = vunpack.c.0.s8 %v736
        %v738 = vlaneseq
        %v739 = vshrl.u32 %v738, 7
        %v740 = vsub.s32 %v737, %v739
        %v741 = vrot.slane %v525, %v740
        %742 = vrot.lane.b32.xlu0 %v741, 83
        %v743 = vpop.permute.xlu0 %742
        %v744 = vrot.slane %v743, 6
        %vm745 = vcmask 678912
        %v746 = vsel %vm745, %v744, %v743
        %v748 = vmul.f32 %v733, %v746
        %750 = vrot.lane.b32.xlu0 %v748, 122
        %v751 = vpop.permute.xlu0 %750
        %v752 = vrot.slane %v751, 2
        %vm753 = vcmask 998400
        %v754 = vsel %vm753, %v751, %v752
        %v756 = vadd.f32 %v722, %v754
        %s757 = sld [smem:[#allocation7 + $0x7]]
        %v758 = vstv %s757
        %v759 = vmul.f32 %v758, %v526
        %s760 = sld [smem:[#allocation7 + $0x38]]
        %v761 = vstv %s760
        %v762 = vmul.f32 %v761, %v526
        %v764 = vrot.slane %v762, 7
        %v765 = vrot.slane %v764, 2
        %v767 = vadd.f32 %v759, %v765
        %768 = vrot.lane.b32.xlu0 %v545, 93
        %v769 = vpop.permute.xlu0 %768
        %v770 = vrot.slane %v769, 6
        %vm771 = vcmask 760832
        %v772 = vsel %vm771, %v770, %v769
        %v774 = vmul.f32 %v767, %v772
        %776 = vrot.lane.b32.xlu0 %v774, 112
        %v777 = vpop.permute.xlu0 %776
        %v778 = vrot.slane %v777, 2
        %vm779 = vcmask 916480
        %v780 = vsel %vm779, %v777, %v778
        %v782 = vadd.f32 %v756, %v780
        %s783 = sld [smem:[#allocation7 + $0x8]]
        %v784 = vstv %s783
        %v785 = vmul.f32 %v784, %v526
        %s786 = sld [smem:[#allocation7 + $0x39]]
        %v787 = vstv %s786
        %v788 = vmul.f32 %v787, %v526
        %v790 = vrot.slane %v788, 7
        %v791 = vrot.slane %v790, 2
        %v793 = vadd.f32 %v785, %v791
        %794 = vrot.lane.b32.xlu0 %v571, 94
        %v795 = vpop.permute.xlu0 %794
        %v796 = vrot.slane %v795, 6
        %vm797 = vcmask 769024
        %v798 = vsel %vm797, %v796, %v795
        %v800 = vmul.f32 %v793, %v798
        %802 = vrot.lane.b32.xlu0 %v800, 111
        %v803 = vpop.permute.xlu0 %802
        %v804 = vrot.slane %v803, 2
        %vm805 = vcmask 908288
        %v806 = vsel %vm805, %v803, %v804
        %v808 = vadd.f32 %v782, %v806
        %s809 = sld [smem:[#allocation7 + $0x9]]
        %v810 = vstv %s809
        %v811 = vmul.f32 %v810, %v526
        %s812 = sld [smem:[#allocation7 + $0x3a]]
        %v813 = vstv %s812
        %v814 = vmul.f32 %v813, %v526
        %v816 = vrot.slane %v814, 7
        %v817 = vrot.slane %v816, 2
        %v819 = vadd.f32 %v811, %v817
        %820 = vrot.lane.b32.xlu0 %v605, 95
        %v821 = vpop.permute.xlu0 %820
        %v822 = vrot.slane %v821, 6
        %vm823 = vcmask 777216
        %v824 = vsel %vm823, %v822, %v821
        %v826 = vmul.f32 %v819, %v824
        %828 = vrot.lane.b32.xlu0 %v826, 110
        %v829 = vpop.permute.xlu0 %828
        %v830 = vrot.slane %v829, 2
        %vm831 = vcmask 900096
        %v832 = vsel %vm831, %v829, %v830
        %v834 = vadd.f32 %v808, %v832
        %s835 = sld [smem:[#allocation7 + $0xa]]
        %v836 = vstv %s835
        %v837 = vmul.f32 %v836, %v526
        %s838 = sld [smem:[#allocation7 + $0x3b]]
        %v839 = vstv %s838
        %v840 = vmul.f32 %v839, %v526
        %v842 = vrot.slane %v840, 7
        %v843 = vrot.slane %v842, 2
        %v845 = vadd.f32 %v837, %v843
        %846 = vrot.lane.b32.xlu0 %v639, 96
        %v847 = vpop.permute.xlu0 %846
        %v848 = vrot.slane %v847, 6
        %vm849 = vcmask 785408
        %v850 = vsel %vm849, %v848, %v847
        %v852 = vmul.f32 %v845, %v850
        %854 = vrot.lane.b32.xlu0 %v852, 109
        %v855 = vpop.permute.xlu0 %854
        %v856 = vrot.slane %v855, 2
        %vm857 = vcmask 891904
        %v858 = vsel %vm857, %v855, %v856
        %v860 = vadd.f32 %v834, %v858
        %s861 = sld [smem:[#allocation7 + $0xb]]
        %v862 = vstv %s861
        %v863 = vmul.f32 %v862, %v526
        %s864 = sld [smem:[#allocation7 + $0x3c]]
        %v865 = vstv %s864
        %v866 = vmul.f32 %v865, %v526
        %v868 = vrot.slane %v866, 7
        %v869 = vrot.slane %v868, 2
        %v871 = vadd.f32 %v863, %v869
        %872 = vrot.lane.b32.xlu0 %v673, 97
        %v873 = vpop.permute.xlu0 %872
        %v874 = vrot.slane %v873, 6
        %vm875 = vcmask 793600
        %v876 = vsel %vm875, %v874, %v873
        %v878 = vmul.f32 %v871, %v876
        %880 = vrot.lane.b32.xlu0 %v878, 108
        %v881 = vpop.permute.xlu0 %880
        %v882 = vrot.slane %v881, 2
        %vm883 = vcmask 883712
        %v884 = vsel %vm883, %v881, %v882
        %v886 = vadd.f32 %v860, %v884
        %s887 = sld [smem:[#allocation7 + $0xc]]
        %v888 = vstv %s887
        %v889 = vmul.f32 %v888, %v526
        %s890 = sld [smem:[#allocation7 + $0x3d]]
        %v891 = vstv %s890
        %v892 = vmul.f32 %v891, %v526
        %v894 = vrot.slane %v892, 7
        %v895 = vrot.slane %v894, 2
        %v897 = vadd.f32 %v889, %v895
        %898 = vrot.lane.b32.xlu0 %v707, 98
        %v899 = vpop.permute.xlu0 %898
        %v900 = vrot.slane %v899, 6
        %vm901 = vcmask 801792
        %v902 = vsel %vm901, %v900, %v899
        %v904 = vmul.f32 %v897, %v902
        %906 = vrot.lane.b32.xlu0 %v904, 107
        %v907 = vpop.permute.xlu0 %906
        %v908 = vrot.slane %v907, 2
        %vm909 = vcmask 875520
        %v910 = vsel %vm909, %v907, %v908
        %v912 = vadd.f32 %v886, %v910
        %s913 = sld [smem:[#allocation7 + $0xd]]
        %v914 = vstv %s913
        %v915 = vmul.f32 %v914, %v526
        %s916 = sld [smem:[#allocation7 + $0x3e]]
        %v917 = vstv %s916
        %v918 = vmul.f32 %v917, %v526
        %v920 = vrot.slane %v918, 7
        %v921 = vrot.slane %v920, 2
        %v923 = vadd.f32 %v915, %v921
        %924 = vrot.lane.b32.xlu0 %v741, 99
        %v925 = vpop.permute.xlu0 %924
        %v926 = vrot.slane %v925, 6
        %vm927 = vcmask 809984
        %v928 = vsel %vm927, %v926, %v925
        %v930 = vmul.f32 %v923, %v928
        %932 = vrot.lane.b32.xlu0 %v930, 106
        %v933 = vpop.permute.xlu0 %932
        %v934 = vrot.slane %v933, 2
        %vm935 = vcmask 867328
        %v936 = vsel %vm935, %v933, %v934
        %v938 = vadd.f32 %v912, %v936
        %s939 = sld [smem:[#allocation7 + $0xe]]
        %v940 = vstv %s939
        %v941 = vmul.f32 %v940, %v526
        %s942 = sld [smem:[#allocation7 + $0x3f]]
        %v943 = vstv %s942
        %v944 = vmul.f32 %v943, %v526
        %v946 = vrot.slane %v944, 7
        %v947 = vrot.slane %v946, 2
        %v949 = vadd.f32 %v941, %v947
        %950 = vrot.lane.b32.xlu0 %v545, 109
        %v951 = vpop.permute.xlu0 %950
        %v952 = vrot.slane %v951, 6
        %v953 = vsel %vm857, %v952, %v951
        %v955 = vmul.f32 %v949, %v953
        %957 = vrot.lane.b32.xlu0 %v955, 96
        %v958 = vpop.permute.xlu0 %957
        %v959 = vrot.slane %v958, 2
        %v960 = vsel %vm849, %v958, %v959
        %v962 = vadd.f32 %v938, %v960
        %s963 = sld [smem:[#allocation7 + $0xf]]
        %v964 = vstv %s963
        %v965 = vmul.f32 %v964, %v526
        %s966 = sld [smem:[#allocation7 + $0x40]]
        %v967 = vstv %s966
        %v968 = vmul.f32 %v967, %v526
        %v970 = vrot.slane %v968, 7
        %v971 = vrot.slane %v970, 2
        %v973 = vadd.f32 %v965, %v971
        %974 = vrot.lane.b32.xlu0 %v571, 110
        %v975 = vpop.permute.xlu0 %974
        %v976 = vrot.slane %v975, 6
        %v977 = vsel %vm831, %v976, %v975
        %v979 = vmul.f32 %v973, %v977
        %981 = vrot.lane.b32.xlu0 %v979, 95
        %v982 = vpop.permute.xlu0 %981
        %v983 = vrot.slane %v982, 2
        %v984 = vsel %vm823, %v982, %v983
        %v986 = vadd.f32 %v962, %v984
        %s987 = sld [smem:[#allocation7 + $0x10]]
        %v988 = vstv %s987
        %v989 = vmul.f32 %v988, %v526
        %s990 = sld [smem:[#allocation7 + $0x41]]
        %v991 = vstv %s990
        %v992 = vmul.f32 %v991, %v526
        %v994 = vrot.slane %v992, 7
        %v995 = vrot.slane %v994, 2
        %v997 = vadd.f32 %v989, %v995
        %998 = vrot.lane.b32.xlu0 %v605, 111
        %v999 = vpop.permute.xlu0 %998
        %v1000 = vrot.slane %v999, 6
        %v1001 = vsel %vm805, %v1000, %v999
        %v1003 = vmul.f32 %v997, %v1001
        %1005 = vrot.lane.b32.xlu0 %v1003, 94
        %v1006 = vpop.permute.xlu0 %1005
        %v1007 = vrot.slane %v1006, 2
        %v1008 = vsel %vm797, %v1006, %v1007
        %v1010 = vadd.f32 %v986, %v1008
        %s1011 = sld [smem:[#allocation7 + $0x11]]
        %v1012 = vstv %s1011
        %v1013 = vmul.f32 %v1012, %v526
        %s1014 = sld [smem:[#allocation7 + $0x42]]
        %v1015 = vstv %s1014
        %v1016 = vmul.f32 %v1015, %v526
        %v1018 = vrot.slane %v1016, 7
        %v1019 = vrot.slane %v1018, 2
        %v1021 = vadd.f32 %v1013, %v1019
        %1022 = vrot.lane.b32.xlu0 %v639, 112
        %v1023 = vpop.permute.xlu0 %1022
        %v1024 = vrot.slane %v1023, 6
        %v1025 = vsel %vm779, %v1024, %v1023
        %v1027 = vmul.f32 %v1021, %v1025
        %1029 = vrot.lane.b32.xlu0 %v1027, 93
        %v1030 = vpop.permute.xlu0 %1029
        %v1031 = vrot.slane %v1030, 2
        %v1032 = vsel %vm771, %v1030, %v1031
        %v1034 = vadd.f32 %v1010, %v1032
        %s1035 = sld [smem:[#allocation7 + $0x12]]
        %v1036 = vstv %s1035
        %v1037 = vmul.f32 %v1036, %v526
        %s1038 = sld [smem:[#allocation7 + $0x43]]
        %v1039 = vstv %s1038
        %v1040 = vmul.f32 %v1039, %v526
        %v1042 = vrot.slane %v1040, 7
        %v1043 = vrot.slane %v1042, 2
        %v1045 = vadd.f32 %v1037, %v1043
        %1046 = vrot.lane.b32.xlu0 %v673, 113
        %v1047 = vpop.permute.xlu0 %1046
        %v1048 = vrot.slane %v1047, 6
        %vm1049 = vcmask 924672
        %v1050 = vsel %vm1049, %v1048, %v1047
        %v1052 = vmul.f32 %v1045, %v1050
        %1054 = vrot.lane.b32.xlu0 %v1052, 92
        %v1055 = vpop.permute.xlu0 %1054
        %v1056 = vrot.slane %v1055, 2
        %vm1057 = vcmask 752640
        %v1058 = vsel %vm1057, %v1055, %v1056
        %v1060 = vadd.f32 %v1034, %v1058
        %s1061 = sld [smem:[#allocation7 + $0x13]]
        %v1062 = vstv %s1061
        %v1063 = vmul.f32 %v1062, %v526
        %s1064 = sld [smem:[#allocation7 + $0x44]]
        %v1065 = vstv %s1064
        %v1066 = vmul.f32 %v1065, %v526
        %v1068 = vrot.slane %v1066, 7
        %v1069 = vrot.slane %v1068, 2
        %v1071 = vadd.f32 %v1063, %v1069
        %1072 = vrot.lane.b32.xlu0 %v707, 114
        %v1073 = vpop.permute.xlu0 %1072
        %v1074 = vrot.slane %v1073, 6
        %vm1075 = vcmask 932864
        %v1076 = vsel %vm1075, %v1074, %v1073
        %v1078 = vmul.f32 %v1071, %v1076
        %1080 = vrot.lane.b32.xlu0 %v1078, 91
        %v1081 = vpop.permute.xlu0 %1080
        %v1082 = vrot.slane %v1081, 2
        %vm1083 = vcmask 744448
        %v1084 = vsel %vm1083, %v1081, %v1082
        %v1086 = vadd.f32 %v1060, %v1084
        %s1087 = sld [smem:[#allocation7 + $0x14]]
        %v1088 = vstv %s1087
        %v1089 = vmul.f32 %v1088, %v526
        %s1090 = sld [smem:[#allocation7 + $0x45]]
        %v1091 = vstv %s1090
        %v1092 = vmul.f32 %v1091, %v526
        %v1094 = vrot.slane %v1092, 7
        %v1095 = vrot.slane %v1094, 2
        %v1097 = vadd.f32 %v1089, %v1095
        %1098 = vrot.lane.b32.xlu0 %v741, 115
        %v1099 = vpop.permute.xlu0 %1098
        %v1100 = vrot.slane %v1099, 6
        %vm1101 = vcmask 941056
        %v1102 = vsel %vm1101, %v1100, %v1099
        %v1104 = vmul.f32 %v1097, %v1102
        %1106 = vrot.lane.b32.xlu0 %v1104, 90
        %v1107 = vpop.permute.xlu0 %1106
        %v1108 = vrot.slane %v1107, 2
        %vm1109 = vcmask 736256
        %v1110 = vsel %vm1109, %v1107, %v1108
        %v1112 = vadd.f32 %v1086, %v1110
        %s1113 = sld [smem:[#allocation7 + $0x15]]
        %v1114 = vstv %s1113
        %v1115 = vmul.f32 %v1114, %v526
        %s1116 = sld [smem:[#allocation7 + $0x46]]
        %v1117 = vstv %s1116
        %v1118 = vmul.f32 %v1117, %v526
        %v1120 = vrot.slane %v1118, 7
        %v1121 = vrot.slane %v1120, 2
        %v1123 = vadd.f32 %v1115, %v1121
        %1124 = vrot.lane.b32.xlu0 %v545, 125
        %v1125 = vpop.permute.xlu0 %1124
        %v1126 = vrot.slane %v1125, 6
        %v1127 = vsel %vm651, %v1126, %v1125
        %v1129 = vmul.f32 %v1123, %v1127
        %1131 = vrot.lane.b32.xlu0 %v1129, 80
        %v1132 = vpop.permute.xlu0 %1131
        %v1133 = vrot.slane %v1132, 2
        %v1134 = vsel %vm643, %v1132, %v1133
        %v1136 = vadd.f32 %v1112, %v1134
        %s1137 = sld [smem:[#allocation7 + $0x16]]
        %v1138 = vstv %s1137
        %v1139 = vmul.f32 %v1138, %v526
        %s1140 = sld [smem:[#allocation7 + $0x47]]
        %v1141 = vstv %s1140
        %v1142 = vmul.f32 %v1141, %v526
        %v1144 = vrot.slane %v1142, 7
        %v1145 = vrot.slane %v1144, 2
        %v1147 = vadd.f32 %v1139, %v1145
        %1148 = vrot.lane.b32.xlu0 %v571, 126
        %v1149 = vpop.permute.xlu0 %1148
        %v1150 = vrot.slane %v1149, 6
        %v1151 = vsel %vm617, %v1150, %v1149
        %v1153 = vmul.f32 %v1147, %v1151
        %1155 = vrot.lane.b32.xlu0 %v1153, 79
        %v1156 = vpop.permute.xlu0 %1155
        %v1157 = vrot.slane %v1156, 2
        %v1158 = vsel %vm609, %v1156, %v1157
        %v1160 = vadd.f32 %v1136, %v1158
        %s1161 = sld [smem:[#allocation7 + $0x17]]
        %v1162 = vstv %s1161
        %v1163 = vmul.f32 %v1162, %v526
        %s1164 = sld [smem:[#allocation7 + $0x48]]
        %v1165 = vstv %s1164
        %v1166 = vmul.f32 %v1165, %v526
        %v1168 = vrot.slane %v1166, 7
        %v1169 = vrot.slane %v1168, 2
        %v1171 = vadd.f32 %v1163, %v1169
        %1172 = vrot.lane.b32.xlu0 %v605, 127
        %v1173 = vpop.permute.xlu0 %1172
        %v1174 = vrot.slane %v1173, 6
        %v1175 = vsel %vm583, %v1174, %v1173
        %v1177 = vmul.f32 %v1171, %v1175
        %1179 = vrot.lane.b32.xlu0 %v1177, 78
        %v1180 = vpop.permute.xlu0 %1179
        %v1181 = vrot.slane %v1180, 2
        %v1182 = vsel %vm575, %v1180, %v1181
        %v1184 = vadd.f32 %v1160, %v1182
        %v1185 = vld [vmem:[#allocation2 + $0x2] sm:$0xf]
        %s1186 = sld [smem:[#allocation7 + $0x18]]
        %v1187 = vstv %s1186
        %v1188 = vmul.f32 %v1187, %v1185
        %s1189 = sld [smem:[#allocation7 + $0x49]]
        %v1190 = vstv %s1189
        %v1191 = vmul.f32 %v1190, %v1185
        %v1193 = vrot.slane %v1191, 7
        %v1194 = vrot.slane %v1193, 2
        %v1196 = vadd.f32 %v1188, %v1194
        %v1198 = vmul.f32 %v1196, %v639
        %1200 = vrot.lane.b32.xlu0 %v1198, 77
        %v1201 = vpop.permute.xlu0 %1200
        %v1202 = vrot.slane %v1201, 6
        %v1203 = vsel %vm549, %v1202, %v1201
        %v1205 = vadd.f32 %v1184, %v1203
        %v1206 = vld [vmem:[#allocation2 + $0x2] sm:$0x3f]
        %s1207 = sld [smem:[#allocation7 + $0x19]]
        %v1208 = vstv %s1207
        %v1209 = vmul.f32 %v1208, %v1206
        %s1210 = sld [smem:[#allocation7 + $0x4a]]
        %v1211 = vstv %s1210
        %v1212 = vmul.f32 %v1211, %v1206
        %v1214 = vrot.slane %v1212, 7
        %v1215 = vrot.slane %v1214, 2
        %v1217 = vadd.f32 %v1209, %v1215
        %1218 = vrot.lane.b32.xlu0 %v673, 1
        %v1219 = vpop.permute.xlu0 %1218
        %v1220 = vrot.slane %v1219, 6
        %vm1221 = vcmask 7168
        %v1222 = vsel %vm1221, %v1220, %v1219
        %v1224 = vmul.f32 %v1217, %v1222
        %1226 = vrot.lane.b32.xlu0 %v1224, 76
        %v1227 = vpop.permute.xlu0 %1226
        %v1228 = vrot.slane %v1227, 6
        %vm1229 = vcmask 621568
        %v1230 = vsel %vm1229, %v1228, %v1227
        %v1232 = vadd.f32 %v1205, %v1230
        %s1233 = sld [smem:[#allocation7 + $0x1a]]
        %v1234 = vstv %s1233
        %v1235 = vmul.f32 %v1234, %v1206
        %s1236 = sld [smem:[#allocation7 + $0x4b]]
        %v1237 = vstv %s1236
        %v1238 = vmul.f32 %v1237, %v1206
        %v1240 = vrot.slane %v1238, 7
        %v1241 = vrot.slane %v1240, 2
        %v1243 = vadd.f32 %v1235, %v1241
        %1244 = vrot.lane.b32.xlu0 %v707, 2
        %v1245 = vpop.permute.xlu0 %1244
        %v1246 = vrot.slane %v1245, 6
        %v1247 = vsel %vm341, %v1246, %v1245
        %v1249 = vmul.f32 %v1243, %v1247
        %1251 = vrot.lane.b32.xlu0 %v1249, 75
        %v1252 = vpop.permute.xlu0 %1251
        %v1253 = vrot.slane %v1252, 6
        %vm1254 = vcmask 613376
        %v1255 = vsel %vm1254, %v1253, %v1252
        %v1257 = vadd.f32 %v1232, %v1255
        %s1258 = sld [smem:[#allocation7 + $0x1b]]
        %v1259 = vstv %s1258
        %v1260 = vmul.f32 %v1259, %v1206
        %s1261 = sld [smem:[#allocation7 + $0x4c]]
        %v1262 = vstv %s1261
        %v1263 = vmul.f32 %v1262, %v1206
        %v1265 = vrot.slane %v1263, 7
        %v1266 = vrot.slane %v1265, 2
        %v1268 = vadd.f32 %v1260, %v1266
        %1269 = vrot.lane.b32.xlu0 %v741, 3
        %v1270 = vpop.permute.xlu0 %1269
        %v1271 = vrot.slane %v1270, 6
        %vm1272 = vcmask 23552
        %v1273 = vsel %vm1272, %v1271, %v1270
        %v1275 = vmul.f32 %v1268, %v1273
        %1277 = vrot.lane.b32.xlu0 %v1275, 74
        %v1278 = vpop.permute.xlu0 %1277
        %v1279 = vrot.slane %v1278, 6
        %vm1280 = vcmask 605184
        %v1281 = vsel %vm1280, %v1279, %v1278
        %v1283 = vadd.f32 %v1257, %v1281
        %s1284 = sld [smem:[#allocation7 + $0x1c]]
        %v1285 = vstv %s1284
        %v1286 = vmul.f32 %v1285, %v1206
        %s1287 = sld [smem:[#allocation7 + $0x4d]]
        %v1288 = vstv %s1287
        %v1289 = vmul.f32 %v1288, %v1206
        %v1291 = vrot.slane %v1289, 7
        %v1292 = vrot.slane %v1291, 2
        %v1294 = vadd.f32 %v1286, %v1292
        %1295 = vrot.lane.b32.xlu0 %v545, 13
        %v1296 = vpop.permute.xlu0 %1295
        %v1297 = vrot.slane %v1296, 6
        %vm1298 = vcmask 105472
        %v1299 = vsel %vm1298, %v1297, %v1296
        %v1301 = vmul.f32 %v1294, %v1299
        %1303 = vrot.lane.b32.xlu0 %v1301, 64
        %v1304 = vpop.permute.xlu0 %1303
        %v1305 = vrot.slane %v1304, 6
        %vm1306 = vcmask 523264
        %v1307 = vsel %vm1306, %v1305, %v1304
        %v1309 = vadd.f32 %v1283, %v1307
        %s1310 = sld [smem:[#allocation7 + $0x1d]]
        %v1311 = vstv %s1310
        %v1312 = vmul.f32 %v1311, %v1206
        %s1313 = sld [smem:[#allocation7 + $0x4e]]
        %v1314 = vstv %s1313
        %v1315 = vmul.f32 %v1314, %v1206
        %v1317 = vrot.slane %v1315, 7
        %v1318 = vrot.slane %v1317, 2
        %v1320 = vadd.f32 %v1312, %v1318
        %1321 = vrot.lane.b32.xlu0 %v571, 14
        %v1322 = vpop.permute.xlu0 %1321
        %v1323 = vrot.slane %v1322, 6
        %vm1324 = vcmask 113664
        %v1325 = vsel %vm1324, %v1323, %v1322
        %v1327 = vmul.f32 %v1320, %v1325
        %1329 = vrot.lane.b32.xlu0 %v1327, 63
        %v1330 = vpop.permute.xlu0 %1329
        %v1331 = vrot.slane %v1330, 6
        %vm1332 = vcmask 515072
        %v1333 = vsel %vm1332, %v1331, %v1330
        %v1335 = vadd.f32 %v1309, %v1333
        %s1336 = sld [smem:[#allocation7 + $0x1e]]
        %v1337 = vstv %s1336
        %v1338 = vmul.f32 %v1337, %v1206
        %s1339 = sld [smem:[#allocation7 + $0x4f]]
        %v1340 = vstv %s1339
        %v1341 = vmul.f32 %v1340, %v1206
        %v1343 = vrot.slane %v1341, 7
        %v1344 = vrot.slane %v1343, 2
        %v1346 = vadd.f32 %v1338, %v1344
        %1347 = vrot.lane.b32.xlu0 %v605, 15
        %v1348 = vpop.permute.xlu0 %1347
        %v1349 = vrot.slane %v1348, 6
        %vm1350 = vcmask 121856
        %v1351 = vsel %vm1350, %v1349, %v1348
        %v1353 = vmul.f32 %v1346, %v1351
        %1355 = vrot.lane.b32.xlu0 %v1353, 62
        %v1356 = vpop.permute.xlu0 %1355
        %v1357 = vrot.slane %v1356, 6
        %vm1358 = vcmask 506880
        %v1359 = vsel %vm1358, %v1357, %v1356
        %v1361 = vadd.f32 %v1335, %v1359
        %s1362 = sld [smem:[#allocation7 + $0x1f]]
        %v1363 = vstv %s1362
        %v1364 = vmul.f32 %v1363, %v1206
        %s1365 = sld [smem:[#allocation7 + $0x50]]
        %v1366 = vstv %s1365
        %v1367 = vmul.f32 %v1366, %v1206
        %v1369 = vrot.slane %v1367, 7
        %v1370 = vrot.slane %v1369, 2
        %v1372 = vadd.f32 %v1364, %v1370
        %1373 = vrot.lane.b32.xlu0 %v639, 16
        %v1374 = vpop.permute.xlu0 %1373
        %v1375 = vrot.slane %v1374, 6
        %vm1376 = vcmask 130048
        %v1377 = vsel %vm1376, %v1375, %v1374
        %v1379 = vmul.f32 %v1372, %v1377
        %1381 = vrot.lane.b32.xlu0 %v1379, 61
        %v1382 = vpop.permute.xlu0 %1381
        %v1383 = vrot.slane %v1382, 6
        %vm1384 = vcmask 498688
        %v1385 = vsel %vm1384, %v1383, %v1382
        %v1387 = vadd.f32 %v1361, %v1385
        %s1388 = sld [smem:[#allocation7 + $0x20]]
        %v1389 = vstv %s1388
        %v1390 = vmul.f32 %v1389, %v1206
        %s1391 = sld [smem:[#allocation7 + $0x51]]
        %v1392 = vstv %s1391
        %v1393 = vmul.f32 %v1392, %v1206
        %v1395 = vrot.slane %v1393, 7
        %v1396 = vrot.slane %v1395, 2
        %v1398 = vadd.f32 %v1390, %v1396
        %1399 = vrot.lane.b32.xlu0 %v673, 17
        %v1400 = vpop.permute.xlu0 %1399
        %v1401 = vrot.slane %v1400, 6
        %vm1402 = vcmask 138240
        %v1403 = vsel %vm1402, %v1401, %v1400
        %v1405 = vmul.f32 %v1398, %v1403
        %1407 = vrot.lane.b32.xlu0 %v1405, 60
        %v1408 = vpop.permute.xlu0 %1407
        %v1409 = vrot.slane %v1408, 6
        %vm1410 = vcmask 490496
        %v1411 = vsel %vm1410, %v1409, %v1408
        %v1413 = vadd.f32 %v1387, %v1411
        %s1414 = sld [smem:[#allocation7 + $0x21]]
        %v1415 = vstv %s1414
        %v1416 = vmul.f32 %v1415, %v1206
        %s1417 = sld [smem:[#allocation7 + $0x52]]
        %v1418 = vstv %s1417
        %v1419 = vmul.f32 %v1418, %v1206
        %v1421 = vrot.slane %v1419, 7
        %v1422 = vrot.slane %v1421, 2
        %v1424 = vadd.f32 %v1416, %v1422
        %1425 = vrot.lane.b32.xlu0 %v707, 18
        %v1426 = vpop.permute.xlu0 %1425
        %v1427 = vrot.slane %v1426, 6
        %vm1428 = vcmask 146432
        %v1429 = vsel %vm1428, %v1427, %v1426
        %v1431 = vmul.f32 %v1424, %v1429
        %1433 = vrot.lane.b32.xlu0 %v1431, 59
        %v1434 = vpop.permute.xlu0 %1433
        %v1435 = vrot.slane %v1434, 6
        %vm1436 = vcmask 482304
        %v1437 = vsel %vm1436, %v1435, %v1434
        %v1439 = vadd.f32 %v1413, %v1437
        %s1440 = sld [smem:[#allocation7 + $0x22]]
        %v1441 = vstv %s1440
        %v1442 = vmul.f32 %v1441, %v1206
        %s1443 = sld [smem:[#allocation7 + $0x53]]
        %v1444 = vstv %s1443
        %v1445 = vmul.f32 %v1444, %v1206
        %v1447 = vrot.slane %v1445, 7
        %v1448 = vrot.slane %v1447, 2
        %v1450 = vadd.f32 %v1442, %v1448
        %1451 = vrot.lane.b32.xlu0 %v741, 19
        %v1452 = vpop.permute.xlu0 %1451
        %v1453 = vrot.slane %v1452, 6
        %vm1454 = vcmask 154624
        %v1455 = vsel %vm1454, %v1453, %v1452
        %v1457 = vmul.f32 %v1450, %v1455
        %1459 = vrot.lane.b32.xlu0 %v1457, 58
        %v1460 = vpop.permute.xlu0 %1459
        %v1461 = vrot.slane %v1460, 6
        %vm1462 = vcmask 474112
        %v1463 = vsel %vm1462, %v1461, %v1460
        %v1465 = vadd.f32 %v1439, %v1463
        %s1466 = sld [smem:[#allocation7 + $0x23]]
        %v1467 = vstv %s1466
        %v1468 = vmul.f32 %v1467, %v1206
        %s1469 = sld [smem:[#allocation7 + $0x54]]
        %v1470 = vstv %s1469
        %v1471 = vmul.f32 %v1470, %v1206
        %v1473 = vrot.slane %v1471, 7
        %v1474 = vrot.slane %v1473, 2
        %v1476 = vadd.f32 %v1468, %v1474
        %1477 = vrot.lane.b32.xlu0 %v545, 29
        %v1478 = vpop.permute.xlu0 %1477
        %v1479 = vrot.slane %v1478, 6
        %vm1480 = vcmask 236544
        %v1481 = vsel %vm1480, %v1479, %v1478
        %v1483 = vmul.f32 %v1476, %v1481
        %1485 = vrot.lane.b32.xlu0 %v1483, 48
        %v1486 = vpop.permute.xlu0 %1485
        %v1487 = vrot.slane %v1486, 6
        %vm1488 = vcmask 392192
        %v1489 = vsel %vm1488, %v1487, %v1486
        %v1491 = vadd.f32 %v1465, %v1489
        %s1492 = sld [smem:[#allocation7 + $0x24]]
        %v1493 = vstv %s1492
        %v1494 = vmul.f32 %v1493, %v1206
        %s1495 = sld [smem:[#allocation7 + $0x55]]
        %v1496 = vstv %s1495
        %v1497 = vmul.f32 %v1496, %v1206
        %v1499 = vrot.slane %v1497, 7
        %v1500 = vrot.slane %v1499, 2
        %v1502 = vadd.f32 %v1494, %v1500
        %1503 = vrot.lane.b32.xlu0 %v571, 30
        %v1504 = vpop.permute.xlu0 %1503
        %v1505 = vrot.slane %v1504, 6
        %vm1506 = vcmask 244736
        %v1507 = vsel %vm1506, %v1505, %v1504
        %v1509 = vmul.f32 %v1502, %v1507
        %1511 = vrot.lane.b32.xlu0 %v1509, 47
        %v1512 = vpop.permute.xlu0 %1511
        %v1513 = vrot.slane %v1512, 6
        %vm1514 = vcmask 384000
        %v1515 = vsel %vm1514, %v1513, %v1512
        %v1517 = vadd.f32 %v1491, %v1515
        %s1518 = sld [smem:[#allocation7 + $0x25]]
        %v1519 = vstv %s1518
        %v1520 = vmul.f32 %v1519, %v1206
        %s1521 = sld [smem:[#allocation7 + $0x56]]
        %v1522 = vstv %s1521
        %v1523 = vmul.f32 %v1522, %v1206
        %v1525 = vrot.slane %v1523, 7
        %v1526 = vrot.slane %v1525, 2
        %v1528 = vadd.f32 %v1520, %v1526
        %1529 = vrot.lane.b32.xlu0 %v605, 31
        %v1530 = vpop.permute.xlu0 %1529
        %v1531 = vrot.slane %v1530, 6
        %vm1532 = vcmask 252928
        %v1533 = vsel %vm1532, %v1531, %v1530
        %v1535 = vmul.f32 %v1528, %v1533
        %1537 = vrot.lane.b32.xlu0 %v1535, 46
        %v1538 = vpop.permute.xlu0 %1537
        %v1539 = vrot.slane %v1538, 6
        %vm1540 = vcmask 375808
        %v1541 = vsel %vm1540, %v1539, %v1538
        %v1543 = vadd.f32 %v1517, %v1541
        %s1544 = sld [smem:[#allocation7 + $0x26]]
        %v1545 = vstv %s1544
        %v1546 = vmul.f32 %v1545, %v1206
        %s1547 = sld [smem:[#allocation7 + $0x57]]
        %v1548 = vstv %s1547
        %v1549 = vmul.f32 %v1548, %v1206
        %v1551 = vrot.slane %v1549, 7
        %v1552 = vrot.slane %v1551, 2
        %v1554 = vadd.f32 %v1546, %v1552
        %1555 = vrot.lane.b32.xlu0 %v639, 32
        %v1556 = vpop.permute.xlu0 %1555
        %v1557 = vrot.slane %v1556, 6
        %vm1558 = vcmask 261120
        %v1559 = vsel %vm1558, %v1557, %v1556
        %v1561 = vmul.f32 %v1554, %v1559
        %1563 = vrot.lane.b32.xlu0 %v1561, 45
        %v1564 = vpop.permute.xlu0 %1563
        %v1565 = vrot.slane %v1564, 6
        %vm1566 = vcmask 367616
        %v1567 = vsel %vm1566, %v1565, %v1564
        %v1569 = vadd.f32 %v1543, %v1567
        %s1570 = sld [smem:[#allocation7 + $0x27]]
        %v1571 = vstv %s1570
        %v1572 = vmul.f32 %v1571, %v1206
        %s1573 = sld [smem:[#allocation7 + $0x58]]
        %v1574 = vstv %s1573
        %v1575 = vmul.f32 %v1574, %v1206
        %v1577 = vrot.slane %v1575, 7
        %v1578 = vrot.slane %v1577, 2
        %v1580 = vadd.f32 %v1572, %v1578
        %1581 = vrot.lane.b32.xlu0 %v673, 33
        %v1582 = vpop.permute.xlu0 %1581
        %v1583 = vrot.slane %v1582, 6
        %vm1584 = vcmask 269312
        %v1585 = vsel %vm1584, %v1583, %v1582
        %v1587 = vmul.f32 %v1580, %v1585
        %1589 = vrot.lane.b32.xlu0 %v1587, 44
        %v1590 = vpop.permute.xlu0 %1589
        %v1591 = vrot.slane %v1590, 6
        %vm1592 = vcmask 359424
        %v1593 = vsel %vm1592, %v1591, %v1590
        %v1595 = vadd.f32 %v1569, %v1593
        %s1596 = sld [smem:[#allocation7 + $0x28]]
        %v1597 = vstv %s1596
        %v1598 = vmul.f32 %v1597, %v1206
        %s1599 = sld [smem:[#allocation7 + $0x59]]
        %v1600 = vstv %s1599
        %v1601 = vmul.f32 %v1600, %v1206
        %v1603 = vrot.slane %v1601, 7
        %v1604 = vrot.slane %v1603, 2
        %v1606 = vadd.f32 %v1598, %v1604
        %1607 = vrot.lane.b32.xlu0 %v707, 34
        %v1608 = vpop.permute.xlu0 %1607
        %v1609 = vrot.slane %v1608, 6
        %vm1610 = vcmask 277504
        %v1611 = vsel %vm1610, %v1609, %v1608
        %v1613 = vmul.f32 %v1606, %v1611
        %1615 = vrot.lane.b32.xlu0 %v1613, 43
        %v1616 = vpop.permute.xlu0 %1615
        %v1617 = vrot.slane %v1616, 6
        %vm1618 = vcmask 351232
        %v1619 = vsel %vm1618, %v1617, %v1616
        %v1621 = vadd.f32 %v1595, %v1619
        %s1622 = sld [smem:[#allocation7 + $0x29]]
        %v1623 = vstv %s1622
        %v1624 = vmul.f32 %v1623, %v1206
        %s1625 = sld [smem:[#allocation7 + $0x5a]]
        %v1626 = vstv %s1625
        %v1627 = vmul.f32 %v1626, %v1206
        %v1629 = vrot.slane %v1627, 7
        %v1630 = vrot.slane %v1629, 2
        %v1632 = vadd.f32 %v1624, %v1630
        %1633 = vrot.lane.b32.xlu0 %v741, 35
        %v1634 = vpop.permute.xlu0 %1633
        %v1635 = vrot.slane %v1634, 6
        %vm1636 = vcmask 285696
        %v1637 = vsel %vm1636, %v1635, %v1634
        %v1639 = vmul.f32 %v1632, %v1637
        %1641 = vrot.lane.b32.xlu0 %v1639, 42
        %v1642 = vpop.permute.xlu0 %1641
        %v1643 = vrot.slane %v1642, 6
        %vm1644 = vcmask 343040
        %v1645 = vsel %vm1644, %v1643, %v1642
        %v1647 = vadd.f32 %v1621, %v1645
        %s1648 = sld [smem:[#allocation7 + $0x2a]]
        %v1649 = vstv %s1648
        %v1650 = vmul.f32 %v1649, %v1206
        %s1651 = sld [smem:[#allocation7 + $0x5b]]
        %v1652 = vstv %s1651
        %v1653 = vmul.f32 %v1652, %v1206
        %v1655 = vrot.slane %v1653, 7
        %v1656 = vrot.slane %v1655, 2
        %v1658 = vadd.f32 %v1650, %v1656
        %1659 = vrot.lane.b32.xlu0 %v545, 45
        %v1660 = vpop.permute.xlu0 %1659
        %v1661 = vrot.slane %v1660, 6
        %v1662 = vsel %vm1566, %v1661, %v1660
        %v1664 = vmul.f32 %v1658, %v1662
        %1666 = vrot.lane.b32.xlu0 %v1664, 32
        %v1667 = vpop.permute.xlu0 %1666
        %v1668 = vrot.slane %v1667, 6
        %v1669 = vsel %vm1558, %v1668, %v1667
        %v1671 = vadd.f32 %v1647, %v1669
        %s1672 = sld [smem:[#allocation7 + $0x2b]]
        %v1673 = vstv %s1672
        %v1674 = vmul.f32 %v1673, %v1206
        %s1675 = sld [smem:[#allocation7 + $0x5c]]
        %v1676 = vstv %s1675
        %v1677 = vmul.f32 %v1676, %v1206
        %v1679 = vrot.slane %v1677, 7
        %v1680 = vrot.slane %v1679, 2
        %v1682 = vadd.f32 %v1674, %v1680
        %1683 = vrot.lane.b32.xlu0 %v571, 46
        %v1684 = vpop.permute.xlu0 %1683
        %v1685 = vrot.slane %v1684, 6
        %v1686 = vsel %vm1540, %v1685, %v1684
        %v1688 = vmul.f32 %v1682, %v1686
        %1690 = vrot.lane.b32.xlu0 %v1688, 31
        %v1691 = vpop.permute.xlu0 %1690
        %v1692 = vrot.slane %v1691, 6
        %v1693 = vsel %vm1532, %v1692, %v1691
        %v1695 = vadd.f32 %v1671, %v1693
        %s1696 = sld [smem:[#allocation7 + $0x2c]]
        %v1697 = vstv %s1696
        %v1698 = vmul.f32 %v1697, %v1206
        %s1699 = sld [smem:[#allocation7 + $0x5d]]
        %v1700 = vstv %s1699
        %v1701 = vmul.f32 %v1700, %v1206
        %v1703 = vrot.slane %v1701, 7
        %v1704 = vrot.slane %v1703, 2
        %v1706 = vadd.f32 %v1698, %v1704
        %1707 = vrot.lane.b32.xlu0 %v605, 47
        %v1708 = vpop.permute.xlu0 %1707
        %v1709 = vrot.slane %v1708, 6
        %v1710 = vsel %vm1514, %v1709, %v1708
        %v1712 = vmul.f32 %v1706, %v1710
        %1714 = vrot.lane.b32.xlu0 %v1712, 30
        %v1715 = vpop.permute.xlu0 %1714
        %v1716 = vrot.slane %v1715, 6
        %v1717 = vsel %vm1506, %v1716, %v1715
        %v1719 = vadd.f32 %v1695, %v1717
        %s1720 = sld [smem:[#allocation7 + $0x2d]]
        %v1721 = vstv %s1720
        %v1722 = vmul.f32 %v1721, %v1206
        %s1723 = sld [smem:[#allocation7 + $0x5e]]
        %v1724 = vstv %s1723
        %v1725 = vmul.f32 %v1724, %v1206
        %v1727 = vrot.slane %v1725, 7
        %v1728 = vrot.slane %v1727, 2
        %v1730 = vadd.f32 %v1722, %v1728
        %1731 = vrot.lane.b32.xlu0 %v639, 48
        %v1732 = vpop.permute.xlu0 %1731
        %v1733 = vrot.slane %v1732, 6
        %v1734 = vsel %vm1488, %v1733, %v1732
        %v1736 = vmul.f32 %v1730, %v1734
        %1738 = vrot.lane.b32.xlu0 %v1736, 29
        %v1739 = vpop.permute.xlu0 %1738
        %v1740 = vrot.slane %v1739, 6
        %v1741 = vsel %vm1480, %v1740, %v1739
        %v1743 = vadd.f32 %v1719, %v1741
        %s1744 = sld [smem:[#allocation7 + $0x2e]]
        %v1745 = vstv %s1744
        %v1746 = vmul.f32 %v1745, %v1206
        %s1747 = sld [smem:[#allocation7 + $0x5f]]
        %v1748 = vstv %s1747
        %v1749 = vmul.f32 %v1748, %v1206
        %v1751 = vrot.slane %v1749, 7
        %v1752 = vrot.slane %v1751, 2
        %v1754 = vadd.f32 %v1746, %v1752
        %1755 = vrot.lane.b32.xlu0 %v673, 49
        %v1756 = vpop.permute.xlu0 %1755
        %v1757 = vrot.slane %v1756, 6
        %vm1758 = vcmask 400384
        %v1759 = vsel %vm1758, %v1757, %v1756
        %v1761 = vmul.f32 %v1754, %v1759
        %1763 = vrot.lane.b32.xlu0 %v1761, 28
        %v1764 = vpop.permute.xlu0 %1763
        %v1765 = vrot.slane %v1764, 6
        %vm1766 = vcmask 228352
        %v1767 = vsel %vm1766, %v1765, %v1764
        %v1769 = vadd.f32 %v1743, %v1767
        %s1770 = sld [smem:[#allocation7 + $0x2f]]
        %v1771 = vstv %s1770
        %v1772 = vmul.f32 %v1771, %v1206
        %s1773 = sld [smem:[#allocation7 + $0x60]]
        %v1774 = vstv %s1773
        %v1775 = vmul.f32 %v1774, %v1206
        %v1777 = vrot.slane %v1775, 7
        %v1778 = vrot.slane %v1777, 2
        %v1780 = vadd.f32 %v1772, %v1778
        %1781 = vrot.lane.b32.xlu0 %v707, 50
        %v1782 = vpop.permute.xlu0 %1781
        %v1783 = vrot.slane %v1782, 6
        %vm1784 = vcmask 408576
        %v1785 = vsel %vm1784, %v1783, %v1782
        %v1787 = vmul.f32 %v1780, %v1785
        %1789 = vrot.lane.b32.xlu0 %v1787, 27
        %v1790 = vpop.permute.xlu0 %1789
        %v1791 = vrot.slane %v1790, 6
        %vm1792 = vcmask 220160
        %v1793 = vsel %vm1792, %v1791, %v1790
        %v1795 = vadd.f32 %v1769, %v1793
        %s1796 = sld [smem:[#allocation7 + $0x30]]
        %v1797 = vstv %s1796
        %v1798 = vmul.f32 %v1797, %v1206
        %s1799 = sld [smem:[#allocation7 + $0x61]]
        %v1800 = vstv %s1799
        %v1801 = vmul.f32 %v1800, %v1206
        %v1803 = vrot.slane %v1801, 7
        %v1804 = vrot.slane %v1803, 2
        %v1806 = vadd.f32 %v1798, %v1804
        %1807 = vrot.lane.b32.xlu0 %v741, 51
        %v1808 = vpop.permute.xlu0 %1807
        %v1809 = vrot.slane %v1808, 6
        %vm1810 = vcmask 416768
        %v1811 = vsel %vm1810, %v1809, %v1808
        %v1813 = vmul.f32 %v1806, %v1811
        %1815 = vrot.lane.b32.xlu0 %v1813, 26
        %v1816 = vpop.permute.xlu0 %1815
        %v1817 = vrot.slane %v1816, 6
        %vm1818 = vcmask 211968
        %v1819 = vsel %vm1818, %v1817, %v1816
        %v1821 = vadd.f32 %v1795, %v1819
        %v1822 = vxor.u32 %v1821, 2147483648
        %v1823 = vmul.f32 %v1822, 1.442695
        %v1824 = vpow.pop %v1823
        %v1825 = vadd.f32 %v1824, 1.0
        %v1826 = vrcp.pop %v1825
        %v1827 = vmul.f32 1.0, %v1826
        %v1828 = vld [vmem:[%s283] sm:$0xff]
        %v1829 = vld [vmem:[%s283 + $0x8] sm:$0xff]
        %v1830 = vld [vmem:[%s283 + $0x10] sm:$0xff]
        %v1831 = vld [vmem:[%s283 + $0x18] sm:$0xff]
        %v1832 = vld [vmem:[%s283 + $0x20] sm:$0xff]
        %v1833 = vld [vmem:[%s283 + $0x28] sm:$0xff]
        %v1834 = vld [vmem:[%s283 + $0x30] sm:$0xff]
        %v1835 = vld [vmem:[%s283 + $0x38] sm:$0xff]
        %v1837 = vlaneseq
        %v1838 = vshrl.u32 %v1837, 7
        %v1839 = vsub.s32 0, %v1838
        %v1840 = vrot.slane %v1827, %v1839
        %v1841 = vlaneseq
        %v1842 = vshrl.u32 %v1841, 7
        %v1843 = vsub.s32 2, %v1842
        %v1844 = vrot.slane %v1827, %v1843
        %v1845 = vlaneseq
        %v1846 = vshrl.u32 %v1845, 7
        %v1847 = vsub.s32 4, %v1846
        %v1848 = vrot.slane %v1827, %v1847
        %v1852 = vlaneseq
        %v1853 = vshrl.u32 %v1852, 7
        %v1854 = vsub.s32 0, %v1853
        %v1855 = vrot.slane %v1840, %v1854
        %v1856 = vlaneseq
        %v1857 = vshrl.u32 %v1856, 7
        %v1858 = vsub.s32 0, %v1857
        %v1859 = vrot.slane %v1844, %v1858
        %v1860 = vlaneseq
        %v1861 = vshrl.u32 %v1860, 7
        %v1862 = vsub.s32 0, %v1861
        %v1863 = vrot.slane %v1848, %v1862
        %1867 = vrot.lane.b32.xlu0 %v1855, 51
        %v1868 = vpop.permute.xlu0 %1867
        %1869 = vrot.lane.b32.xlu0 %v1859, 51
        %v1870 = vpop.permute.xlu0 %1869
        %1871 = vrot.lane.b32.xlu0 %v1863, 51
        %v1872 = vpop.permute.xlu0 %1871
        %v1873 = vsel %vm1810, %v1868, %v1870
        %v1874 = vsel %vm1810, %v1870, %v1872
        %v1877 = vmul.f32 %v1828, %v1873
        %v1878 = vmul.f32 %v1829, %v1874
        %v1879 = vmul.f32 %v1830, %v1873
        %v1880 = vmul.f32 %v1831, %v1874
        %v1881 = vmul.f32 %v1832, %v1873
        %v1882 = vmul.f32 %v1833, %v1874
        %v1883 = vmul.f32 %v1834, %v1873
        %v1884 = vmul.f32 %v1835, %v1874
        %1885 = vst [vmem:[%s283] sm:$0xff] %v1877
        %1886 = vst [vmem:[%s283 + $0x8] sm:$0xff] %v1878
        %1887 = vst [vmem:[%s283 + $0x10] sm:$0xff] %v1879
        %1888 = vst [vmem:[%s283 + $0x18] sm:$0xff] %v1880
        %1889 = vst [vmem:[%s283 + $0x20] sm:$0xff] %v1881
        %1890 = vst [vmem:[%s283 + $0x28] sm:$0xff] %v1882
        %1891 = vst [vmem:[%s283 + $0x30] sm:$0xff] %v1883
        %1892 = vst [vmem:[%s283 + $0x38] sm:$0xff] %v1884
        %s1893 = sand.u32 %s163, 1
        %s1894 = scalar_lea.sflag [#allocation5], %s1893
        %s1895 = sand.u32 %s163, 1
        %s1896 = smul.addr %s1895, 64
        %s1897 = scalar_lea.vmem [#allocation8], %s1896
        // Predicated region
        $region53: #{tpu_custom_call.1} parent=43 // pred_check
          %p1898 = pneg %p173
        $region54: #{tpu_custom_call.1} parent=43 // pred_check_branch
          %1900 = sbr.rel (%p1898) target = $region56
        $region55: #{tpu_custom_call.1} parent=43 // pred_region
          %s1902 = ssub.s32 1024, 1024
          %1903 = vsyncadd %s1894, %s1902
          %s1904 = smul.addr %s24, 8
          %s1905 = smul.addr %s1904, 128
          %s1906 = scalar_lea.hbm %s6, %s1905
          %s1907 = sshll.u32 %s1897, 4
          %s1908 = int_to_ptr.vmem [resolvable:$true] %s1907
          %1913 = dma.vmem_to_hbm [thread:$0]  %s1908, 1024, %s1906, %s1894, 256, 256, 16
        $region56: #{tpu_custom_call.1} parent=43 // pred_fallthru
          _
      $region44: #{tpu_custom_call.1} parent=5 // pred_fallthru
        _
      %p1914 = scmp.le.s32.totalorder 2, %s19
      // Predicated region
      $region57: #{tpu_custom_call.1} parent=5 // pred_check
        %p1915 = pneg %p1914
      $region58: #{tpu_custom_call.1} parent=5 // pred_check_branch
        %1917 = sbr.rel (%p1915) target = $region60
      $region59: #{tpu_custom_call.1} parent=5 // pred_region
        %s1918 = ssub.s32 %s19, 2
        // Predicated region
        $region61: #{tpu_custom_call.1} parent=59 // pred_check
          %p1919 = pneg %p179
        $region62: #{tpu_custom_call.1} parent=59 // pred_check_branch
          %1921 = sbr.rel (%p1919) target = $region64
        $region63: #{tpu_custom_call.1} parent=59 // pred_region
          %s1922 = sand.u32 %s164, 1
          %s1923 = scalar_lea.sflag [#allocation5], %s1922
          %s1924 = sand.u32 %s164, 1
          %s1925 = smul.addr %s1924, 64
          %s1926 = scalar_lea.vmem [#allocation8], %s1925
          %1927 = dma.done %s1923, 1024
        $region64: #{tpu_custom_call.1} parent=59 // pred_fallthru
          _
      $region60: #{tpu_custom_call.1} parent=5 // pred_fallthru
        _
    $region6: #{tpu_custom_call.1} parent=1 // loop_footer
      %s23 = sadd.s32 1, %s19
    $region7: #{tpu_custom_call.1} parent=1 // loop_footer_branch
      %18 = sbr.rel target = $region3
    $region8: #{tpu_custom_call.1} parent=1 // loop_exit
      _
    %1928 = vsyncpa [#allocation4], 1
    %s1929 = scalar_lea.sflag [#allocation4], 1
    %1930 = vsyncpa %s1929, 1
    %1931 = vsyncpa [#allocation5], 1
    %s1932 = scalar_lea.sflag [#allocation5], 1
    %1933 = vsyncpa %s1932, 1
    %1934 = vsyncpa [#allocation6], 1
    %s1935 = scalar_lea.sflag [#allocation6], 1
    %1936 = vsyncpa %s1935, 1

</llo_original>
